<compile_context>
chip_gen: v7x
topology: tpu7x:2x2x1
jax: 0.10.0
libtpu: 0.0.40
codegen_flags: <defaults>
</compile_context>

<pallas_src>
import functools

import jax
import jax.numpy as jnp
from jax.experimental import pallas as pl
from jax.experimental.pallas import tpu as pltpu


_DTYPE = jnp.bfloat16                      # activation / weight dtype on the MXU path
_VMEM = pltpu.MemorySpace.VMEM
_SMEM = pltpu.MemorySpace.SMEM


# ----------------------------------------------------------------------------
# In-kernel helpers (trace-time Python; all loops are small & fully unrolled)
# ----------------------------------------------------------------------------

def _fill_padded_rows(pad_ref, rows, Ho, Wo, Wp):
    """Zero the guarded padded scratch (L, C) and write `rows` ((Ho, Wo, C) value)
    into the interior positions of the flattened (Hp*Wp) padded grid."""
    guard = Wp + 1
    pad_ref[...] = jnp.zeros_like(pad_ref)
    for h in range(Ho):
        dst = guard + (h + 1) * Wp + 1
        pad_ref[dst:dst + Wo, :] = rows[h].astype(pad_ref.dtype)


def _fill_padded_from_flat(pad_ref, flat, Ho, Wo, Wp):
    """Same as above but `flat` is a (Rp, C) conv output over the padded grid;
    only its interior rows are copied (borders/guards stay zero for the next conv)."""
    guard = Wp + 1
    pad_ref[...] = jnp.zeros_like(pad_ref)
    for h in range(Ho):
        src = (h + 1) * Wp + 1
        pad_ref[guard + src:guard + src + Wo, :] = flat[src:src + Wo, :].astype(pad_ref.dtype)


def _conv3x3_slab(pad_ref, Rp, Wp):
    """Lane-concat the 9 shifted tap slabs of the guarded padded scratch into a single
    (Rp, 9*C) matrix so the conv is one K=9*C MXU contraction."""
    guard = Wp + 1
    slabs = []
    for kh in range(3):
        for kw in range(3):
            s = guard + (kh - 1) * Wp + (kw - 1)
            slabs.append(pad_ref[s:s + Rp, :])
    return jnp.concatenate(slabs, axis=-1)


def _store_interior(o_ref, flat, Ho, Wo, Wp):
    """Write the interior rows of a (Rp, Cout) conv output into o_ref (1, Ho, Wo, Cout)."""
    for h in range(Ho):
        src = (h + 1) * Wp + 1
        o_ref[0, h, :, :] = flat[src:src + Wo, :].astype(o_ref.dtype)


def _pool2x2(x, cin):
    """x: (Ho, 2, Wo, 2*Cin) value (metadata reshape of one NHWC image) -> (Ho, Wo, Cin)."""
    s = (x[:, 0, :, :cin].astype(jnp.float32) + x[:, 0, :, cin:].astype(jnp.float32)
         + x[:, 1, :, :cin].astype(jnp.float32) + x[:, 1, :, cin:].astype(jnp.float32))
    return s * 0.25


def _lrelu(z):
    return jnp.where(z >= 0.0, z, 0.2 * z)


# ----------------------------------------------------------------------------
# Fused kernels
# ----------------------------------------------------------------------------

def dis_block_kernel(x_ref, w1_ref, b1_ref, w2_ref, b2_ref, o_ref, pad1_ref, pad2_ref,
                     *, Ho, Wo, Cin):
    """Dis_Block: avg_pool2d(2,2) -> conv3x3+LReLU -> conv3x3+LReLU, one image per step."""
    Wp = Wo + 2
    Rp = (Ho + 2) * Wp

    pooled = _pool2x2(x_ref[0], Cin)                                  # (Ho, Wo, Cin) f32

    # conv1 (3x3, pad 1) + LeakyReLU(0.2); padded slab lives in VMEM scratch.
    _fill_padded_rows(pad1_ref, pooled, Ho, Wo, Wp)
    z1 = jnp.dot(_conv3x3_slab(pad1_ref, Rp, Wp), w1_ref[...],
                 preferred_element_type=jnp.float32) + b1_ref[...]
    a1 = _lrelu(z1)                                                   # (Rp, Cout) f32

    # conv2 (3x3, pad 1) + LeakyReLU(0.2); conv1's interior is re-padded in VMEM.
    _fill_padded_from_flat(pad2_ref, a1, Ho, Wo, Wp)
    z2 = jnp.dot(_conv3x3_slab(pad2_ref, Rp, Wp), w2_ref[...],
                 preferred_element_type=jnp.float32) + b2_ref[...]
    a2 = _lrelu(z2)

    _store_interior(o_ref, a2, Ho, Wo, Wp)


def from_rgb_kernel(x_ref, w_ref, b_ref, o_ref, pad_ref, *, H, W):
    """FROM_RGB_Block: conv3x3(3 -> Cout) + LeakyReLU(0.2), one image per step."""
    Wp = W + 2
    Rp = (H + 2) * Wp
    _fill_padded_rows(pad_ref, x_ref[0], H, W, Wp)
    z = jnp.dot(_conv3x3_slab(pad_ref, Rp, Wp), w_ref[...],
                preferred_element_type=jnp.float32) + b_ref[...]
    _store_interior(o_ref, _lrelu(z), H, W, Wp)


def pool_rgb_blend_kernel(alpha_ref, x_ref, xlow_ref, w_ref, b_ref, o_ref, pad_ref,
                          *, Ho, Wo):
    """Fade-in path: avg_pool2d(2,2) -> FROM_RGB conv+LReLU -> alpha*x_low + (1-alpha)*x_high."""
    Wp = Wo + 2
    Rp = (Ho + 2) * Wp
    Cin = 3

    pooled = _pool2x2(x_ref[0], Cin)                                  # (Ho, Wo, 3) f32
    _fill_padded_rows(pad_ref, pooled, Ho, Wo, Wp)
    z = jnp.dot(_conv3x3_slab(pad_ref, Rp, Wp), w_ref[...],
                preferred_element_type=jnp.float32) + b_ref[...]
    a = _lrelu(z)                                                     # x_high, (Rp, C) f32

    alpha = alpha_ref[0]                                              # SMEM scalar
    for h in range(Ho):
        src = (h + 1) * Wp + 1
        low = xlow_ref[0, h, :, :].astype(jnp.float32)
        high = a[src:src + Wo, :]
        o_ref[0, h, :, :] = (alpha * low + (1.0 - alpha) * high).astype(o_ref.dtype)


def fc_sigmoid_kernel(x_ref, w_ref, b_ref, o_ref):
    """sigmoid(x @ w + b) with N == 1: VPU multiply + lane reduction (no MXU)."""
    x = x_ref[...].astype(jnp.float32)                                # (B, K)
    w = w_ref[...]                                                    # (1, K) f32
    z = jnp.sum(x * w, axis=-1, keepdims=True) + b_ref[...]           # (B, 1)
    o_ref[...] = 1.0 / (1.0 + jnp.exp(-z))


# ----------------------------------------------------------------------------
# Wrappers (layout glue + pallas_call tiling)
# ----------------------------------------------------------------------------

def _guarded_len(Ho, Wo):
    Wp = Wo + 2
    return (Ho + 2) * Wp + 2 * (Wp + 1)


def dis_block_forward(p, x_nhwc):
    B, H, W, Cin = x_nhwc.shape
    assert H % 2 == 0 and W % 2 == 0
    Ho, Wo = H // 2, W // 2
    Cout = p["w1"].shape[-1]
    L = _guarded_len(Ho, Wo)
    # Metadata-only reshape: 2x2 pooling taps become the (2, .., 2*Cin) sub-slices.
    x5 = x_nhwc.astype(_DTYPE).reshape(B, Ho, 2, Wo, 2 * Cin)
    kernel = functools.partial(dis_block_kernel, Ho=Ho, Wo=Wo, Cin=Cin)
    return pl.pallas_call(
        kernel,
        out_shape=jax.ShapeDtypeStruct((B, Ho, Wo, Cout), _DTYPE),
        grid=(B,),
        in_specs=[
            pl.BlockSpec((1, Ho, 2, Wo, 2 * Cin), lambda i: (i, 0, 0, 0, 0)),
            pl.BlockSpec((9 * Cin, Cout), lambda i: (0, 0)),
            pl.BlockSpec((1, Cout), lambda i: (0, 0)),
            pl.BlockSpec((9 * Cout, Cout), lambda i: (0, 0)),
            pl.BlockSpec((1, Cout), lambda i: (0, 0)),
        ],
        out_specs=pl.BlockSpec((1, Ho, Wo, Cout), lambda i: (i, 0, 0, 0)),
        scratch_shapes=[pltpu.VMEM((L, Cin), _DTYPE), pltpu.VMEM((L, Cout), _DTYPE)],
        compiler_params=pltpu.CompilerParams(dimension_semantics=("parallel",)),
    )(x5, p["w1"], p["b1"], p["w2"], p["b2"])


def from_rgb_forward(p, x_nhwc):
    B, H, W, Cin = x_nhwc.shape                     # Cin == 3
    Cout = p["w"].shape[-1]
    L = _guarded_len(H, W)
    kernel = functools.partial(from_rgb_kernel, H=H, W=W)
    return pl.pallas_call(
        kernel,
        out_shape=jax.ShapeDtypeStruct((B, H, W, Cout), _DTYPE),
        grid=(B,),
        in_specs=[
            pl.BlockSpec((1, H, W, Cin), lambda i: (i, 0, 0, 0)),
            pl.BlockSpec((9 * Cin, Cout), lambda i: (0, 0)),
            pl.BlockSpec((1, Cout), lambda i: (0, 0)),
        ],
        out_specs=pl.BlockSpec((1, H, W, Cout), lambda i: (i, 0, 0, 0)),
        scratch_shapes=[pltpu.VMEM((L, Cin), _DTYPE)],
        compiler_params=pltpu.CompilerParams(dimension_semantics=("parallel",)),
    )(x_nhwc.astype(_DTYPE), p["w"], p["b"])


def pool_from_rgb_blend(p, x_rgb_nhwc, x_low, alpha):
    B, H, W, _ = x_rgb_nhwc.shape
    Ho, Wo = H // 2, W // 2
    Cout = p["w"].shape[-1]
    L = _guarded_len(Ho, Wo)
    x5 = x_rgb_nhwc.astype(_DTYPE).reshape(B, Ho, 2, Wo, 6)
    alpha_arr = jnp.asarray(alpha, jnp.float32).reshape(1)            # traced SMEM scalar
    kernel = functools.partial(pool_rgb_blend_kernel, Ho=Ho, Wo=Wo)
    return pl.pallas_call(
        kernel,
        out_shape=jax.ShapeDtypeStruct((B, Ho, Wo, Cout), _DTYPE),
        grid=(B,),
        in_specs=[
            pl.BlockSpec(memory_space=_SMEM),
            pl.BlockSpec((1, Ho, 2, Wo, 6), lambda i: (i, 0, 0, 0, 0)),
            pl.BlockSpec((1, Ho, Wo, Cout), lambda i: (i, 0, 0, 0)),
            pl.BlockSpec((27, Cout), lambda i: (0, 0)),
            pl.BlockSpec((1, Cout), lambda i: (0, 0)),
        ],
        out_specs=pl.BlockSpec((1, Ho, Wo, Cout), lambda i: (i, 0, 0, 0)),
        scratch_shapes=[pltpu.VMEM((L, 3), _DTYPE)],
        compiler_params=pltpu.CompilerParams(dimension_semantics=("parallel",)),
    )(alpha_arr, x5, x_low.astype(_DTYPE), p["w"], p["b"])


def fc_sigmoid(x_flat, w, b):
    B, K = x_flat.shape
    return pl.pallas_call(
        fc_sigmoid_kernel,
        out_shape=jax.ShapeDtypeStruct((B, 1), jnp.float32),
        in_specs=[pl.BlockSpec(memory_space=_VMEM)] * 3,
        out_specs=pl.BlockSpec(memory_space=_VMEM),
    )(x_flat.astype(_DTYPE),
      w.reshape(1, K).astype(jnp.float32),
      b.reshape(1, 1).astype(jnp.float32))


# ----------------------------------------------------------------------------
# Model: parameters + forward (mirrors DISCRIMINATOR.discriminate)
# ----------------------------------------------------------------------------

def _make_conv_params(key, c_in, c_out):
    k1, k2 = jax.random.split(key)
    # PyTorch conv layout (Cout, Cin, KH, KW) -> tap-major, channel-minor rows (9*Cin, Cout),
    # matching the in-kernel slab lane-concat order.  bf16 on the MXU path.
    w = jax.random.normal(k1, (c_out, c_in, 3, 3), jnp.float32) * 0.1
    b = jax.random.normal(k2, (c_out,), jnp.float32) * 0.05
    w_flat = jnp.transpose(w, (2, 3, 1, 0)).reshape(9 * c_in, c_out).astype(_DTYPE)
    return {"w": w_flat, "b": b.reshape(1, c_out)}


def init_discriminator(key, imSize, block_num, fSize):
    outSize = imSize // 2 ** block_num
    params = {"block_num": block_num, "from_rgb": [], "dis": []}
    for i in range(block_num):
        c_in = (2 ** (i - 1) if i != 0 else 1) * fSize
        c_out = 2 ** i * fSize
        key, k1, k2, k3 = jax.random.split(key, 4)
        params["from_rgb"].append(_make_conv_params(k1, 3, c_in))      # FROM_RGB_Block
        l1 = _make_conv_params(k2, c_in, c_out)                        # Dis_Block.layer1
        l2 = _make_conv_params(k3, c_out, c_out)                       # Dis_Block.layer2
        params["dis"].append({"w1": l1["w"], "b1": l1["b"],
                              "w2": l2["w"], "b2": l2["b"]})
    c_fc = 2 ** (block_num - 1) * fSize
    fc_in = c_fc * outSize * outSize
    key, kw = jax.random.split(key)
    # Generate in PyTorch NCHW-flatten order, then permute the rows once to the internal
    # NHWC-flatten order (folds the pre-FC transpose into the weights).
    w_pt = jax.random.normal(kw, (fc_in, 1), jnp.float32) * 0.02
    w_nhwc = w_pt.reshape(c_fc, outSize, outSize).transpose(1, 2, 0).reshape(fc_in, 1)
    params["fc_w"] = w_nhwc
    params["fc_b"] = jnp.zeros((1,), jnp.float32)
    return params


def discriminator_forward(params, x_nchw, stage, alpha):
    """Matches DISCRIMINATOR.discriminate(x, stage, alpha)."""
    block_num = params["block_num"]
    x = jnp.transpose(x_nchw, (0, 2, 3, 1)).astype(_DTYPE)    # NCHW -> NHWC once
    if stage == 1:
        x = from_rgb_forward(params["from_rgb"][-1], x)
        x = dis_block_forward(params["dis"][-1], x)
    else:
        idx = block_num - stage
        x_low = from_rgb_forward(params["from_rgb"][idx], x)
        x_low = dis_block_forward(params["dis"][idx], x_low)
        # Fused: avg_pool2d -> from_rgb[idx+1] -> alpha-blend with x_low.
        x = pool_from_rgb_blend(params["from_rgb"][idx + 1], x, x_low, alpha)
        for i in range(idx + 1, block_num):
            x = dis_block_forward(params["dis"][i], x)
    flat = x.reshape(x.shape[0], -1)                           # NHWC flatten (fc_w permuted)
    return fc_sigmoid(flat, params["fc_w"], params["fc_b"])


# ----------------------------------------------------------------------------
# Demo
# ----------------------------------------------------------------------------

if __name__ == "__main__":
    imSize, block_num, fSize = 16, 2, 8
    key = jax.random.PRNGKey(0)
    pkey, xkey = jax.random.split(key)
    params = init_discriminator(pkey, imSize, block_num, fSize)

    # stage = block_num (full resolution, fade-in blend path)
    x_full = jax.random.normal(xkey, (2, 3, imSize, imSize), jnp.float32)
    out2 = jax.block_until_ready(discriminator_forward(params, x_full, stage=2, alpha=0.7))
    assert out2.shape == (2, 1)

    # stage = 1 (lowest-resolution path), input spatial = imSize / 2**(block_num-1)
    lo = imSize // 2 ** (block_num - 1)
    x_lo = jax.random.normal(jax.random.PRNGKey(1), (2, 3, lo, lo), jnp.float32)
    out1 = jax.block_until_ready(discriminator_forward(params, x_lo, stage=1, alpha=1.0))
    assert out1.shape == (2, 1)

    assert bool(jnp.all(jnp.isfinite(out1))) and bool(jnp.all(jnp.isfinite(out2)))
    assert bool(jnp.all((out1 > 0) & (out1 < 1))) and bool(jnp.all((out2 > 0) & (out2 < 1)))
    print("KERNEL_OK")
</pallas_src>

<mosaic_0001>
module attributes {stable_mosaic.version = 11 : i64} {
  func.func @from_rgb_kernel(%arg0: i32, %arg1: memref<1x16x16x3xbf16, #tpu.memory_space<vmem>>, %arg2: memref<27x8xbf16, #tpu.memory_space<vmem>>, %arg3: memref<1x8xf32, #tpu.memory_space<vmem>>, %arg4: memref<1x16x16x8xbf16, #tpu.memory_space<vmem>>, %arg5: memref<362x3xbf16, #tpu.memory_space<vmem>>) attributes {dimension_semantics = [#tpu.dimension_semantics<parallel>], iteration_bounds = array<i64: 2>, scalar_prefetch = 0 : i64, scratch_operands = 1 : i64, tpu.core_type = #tpu.core_type<tc>, window_params = [{transform_indices = @transform_0, window_bounds = array<i64: 1, 16, 16, 3>}, {pipeline_mode = #tpu.pipeline_mode<synchronous>, transform_indices = @transform_1, window_bounds = array<i64: 27, 8>}, {pipeline_mode = #tpu.pipeline_mode<synchronous>, transform_indices = @transform_2, window_bounds = array<i64: 1, 8>}, {transform_indices = @transform_3, window_bounds = array<i64: 1, 16, 16, 8>}]} {
    %c0 = arith.constant 0 : index
    %c0_0 = arith.constant 0 : index
    %c0_1 = arith.constant 0 : index
    %c0_2 = arith.constant 0 : index
    %0 = vector.load %arg1[%c0, %c0_0, %c0_1, %c0_2] : memref<1x16x16x3xbf16, #tpu.memory_space<vmem>>, vector<1x16x16x3xbf16>
    %1 = vector.shape_cast %0 : vector<1x16x16x3xbf16> to vector<16x16x3xbf16>
    %cst = arith.constant 0.000000e+00 : bf16
    %2 = vector.broadcast %cst : bf16 to vector<362x3xbf16>
    %c0_3 = arith.constant 0 : index
    %c0_4 = arith.constant 0 : index
    %3 = vector.load %arg5[%c0_3, %c0_4] : memref<362x3xbf16, #tpu.memory_space<vmem>>, vector<362x3xbf16>
    tpu.vector_store %arg5[%c0_3, %c0_4], %2 {strides = array<i32>} : memref<362x3xbf16, #tpu.memory_space<vmem>>, vector<362x3xbf16>,
    %4 = vector.extract_strided_slice %1 {offsets = [0, 0, 0], sizes = [1, 16, 3], strides = [1, 1, 1]} : vector<16x16x3xbf16> to vector<1x16x3xbf16>
    %5 = vector.shape_cast %4 : vector<1x16x3xbf16> to vector<16x3xbf16>
    %c38 = arith.constant 38 : index
    %c0_5 = arith.constant 0 : index
    %6 = vector.load %arg5[%c38, %c0_5] : memref<362x3xbf16, #tpu.memory_space<vmem>>, vector<16x3xbf16>
    tpu.vector_store %arg5[%c38, %c0_5], %5 {strides = array<i32>} : memref<362x3xbf16, #tpu.memory_space<vmem>>, vector<16x3xbf16>,
    %7 = vector.extract_strided_slice %1 {offsets = [1, 0, 0], sizes = [1, 16, 3], strides = [1, 1, 1]} : vector<16x16x3xbf16> to vector<1x16x3xbf16>
    %8 = vector.shape_cast %7 : vector<1x16x3xbf16> to vector<16x3xbf16>
    %c56 = arith.constant 56 : index
    %c0_6 = arith.constant 0 : index
    %9 = vector.load %arg5[%c56, %c0_6] : memref<362x3xbf16, #tpu.memory_space<vmem>>, vector<16x3xbf16>
    tpu.vector_store %arg5[%c56, %c0_6], %8 {strides = array<i32>} : memref<362x3xbf16, #tpu.memory_space<vmem>>, vector<16x3xbf16>,
    %10 = vector.extract_strided_slice %1 {offsets = [2, 0, 0], sizes = [1, 16, 3], strides = [1, 1, 1]} : vector<16x16x3xbf16> to vector<1x16x3xbf16>
    %11 = vector.shape_cast %10 : vector<1x16x3xbf16> to vector<16x3xbf16>
    %c74 = arith.constant 74 : index
    %c0_7 = arith.constant 0 : index
    %12 = vector.load %arg5[%c74, %c0_7] : memref<362x3xbf16, #tpu.memory_space<vmem>>, vector<16x3xbf16>
    tpu.vector_store %arg5[%c74, %c0_7], %11 {strides = array<i32>} : memref<362x3xbf16, #tpu.memory_space<vmem>>, vector<16x3xbf16>,
    %13 = vector.extract_strided_slice %1 {offsets = [3, 0, 0], sizes = [1, 16, 3], strides = [1, 1, 1]} : vector<16x16x3xbf16> to vector<1x16x3xbf16>
    %14 = vector.shape_cast %13 : vector<1x16x3xbf16> to vector<16x3xbf16>
    %c92 = arith.constant 92 : index
    %c0_8 = arith.constant 0 : index
    %15 = vector.load %arg5[%c92, %c0_8] : memref<362x3xbf16, #tpu.memory_space<vmem>>, vector<16x3xbf16>
    tpu.vector_store %arg5[%c92, %c0_8], %14 {strides = array<i32>} : memref<362x3xbf16, #tpu.memory_space<vmem>>, vector<16x3xbf16>,
    %16 = vector.extract_strided_slice %1 {offsets = [4, 0, 0], sizes = [1, 16, 3], strides = [1, 1, 1]} : vector<16x16x3xbf16> to vector<1x16x3xbf16>
    %17 = vector.shape_cast %16 : vector<1x16x3xbf16> to vector<16x3xbf16>
    %c110 = arith.constant 110 : index
    %c0_9 = arith.constant 0 : index
    %18 = vector.load %arg5[%c110, %c0_9] : memref<362x3xbf16, #tpu.memory_space<vmem>>, vector<16x3xbf16>
    tpu.vector_store %arg5[%c110, %c0_9], %17 {strides = array<i32>} : memref<362x3xbf16, #tpu.memory_space<vmem>>, vector<16x3xbf16>,
    %19 = vector.extract_strided_slice %1 {offsets = [5, 0, 0], sizes = [1, 16, 3], strides = [1, 1, 1]} : vector<16x16x3xbf16> to vector<1x16x3xbf16>
    %20 = vector.shape_cast %19 : vector<1x16x3xbf16> to vector<16x3xbf16>
    %c128 = arith.constant 128 : index
    %c0_10 = arith.constant 0 : index
    %21 = vector.load %arg5[%c128, %c0_10] : memref<362x3xbf16, #tpu.memory_space<vmem>>, vector<16x3xbf16>
    tpu.vector_store %arg5[%c128, %c0_10], %20 {strides = array<i32>} : memref<362x3xbf16, #tpu.memory_space<vmem>>, vector<16x3xbf16>,
    %22 = vector.extract_strided_slice %1 {offsets = [6, 0, 0], sizes = [1, 16, 3], strides = [1, 1, 1]} : vector<16x16x3xbf16> to vector<1x16x3xbf16>
    %23 = vector.shape_cast %22 : vector<1x16x3xbf16> to vector<16x3xbf16>
    %c146 = arith.constant 146 : index
    %c0_11 = arith.constant 0 : index
    %24 = vector.load %arg5[%c146, %c0_11] : memref<362x3xbf16, #tpu.memory_space<vmem>>, vector<16x3xbf16>
    tpu.vector_store %arg5[%c146, %c0_11], %23 {strides = array<i32>} : memref<362x3xbf16, #tpu.memory_space<vmem>>, vector<16x3xbf16>,
    %25 = vector.extract_strided_slice %1 {offsets = [7, 0, 0], sizes = [1, 16, 3], strides = [1, 1, 1]} : vector<16x16x3xbf16> to vector<1x16x3xbf16>
    %26 = vector.shape_cast %25 : vector<1x16x3xbf16> to vector<16x3xbf16>
    %c164 = arith.constant 164 : index
    %c0_12 = arith.constant 0 : index
    %27 = vector.load %arg5[%c164, %c0_12] : memref<362x3xbf16, #tpu.memory_space<vmem>>, vector<16x3xbf16>
    tpu.vector_store %arg5[%c164, %c0_12], %26 {strides = array<i32>} : memref<362x3xbf16, #tpu.memory_space<vmem>>, vector<16x3xbf16>,
    %28 = vector.extract_strided_slice %1 {offsets = [8, 0, 0], sizes = [1, 16, 3], strides = [1, 1, 1]} : vector<16x16x3xbf16> to vector<1x16x3xbf16>
    %29 = vector.shape_cast %28 : vector<1x16x3xbf16> to vector<16x3xbf16>
    %c182 = arith.constant 182 : index
    %c0_13 = arith.constant 0 : index
    %30 = vector.load %arg5[%c182, %c0_13] : memref<362x3xbf16, #tpu.memory_space<vmem>>, vector<16x3xbf16>
    tpu.vector_store %arg5[%c182, %c0_13], %29 {strides = array<i32>} : memref<362x3xbf16, #tpu.memory_space<vmem>>, vector<16x3xbf16>,
    %31 = vector.extract_strided_slice %1 {offsets = [9, 0, 0], sizes = [1, 16, 3], strides = [1, 1, 1]} : vector<16x16x3xbf16> to vector<1x16x3xbf16>
    %32 = vector.shape_cast %31 : vector<1x16x3xbf16> to vector<16x3xbf16>
    %c200 = arith.constant 200 : index
    %c0_14 = arith.constant 0 : index
    %33 = vector.load %arg5[%c200, %c0_14] : memref<362x3xbf16, #tpu.memory_space<vmem>>, vector<16x3xbf16>
    tpu.vector_store %arg5[%c200, %c0_14], %32 {strides = array<i32>} : memref<362x3xbf16, #tpu.memory_space<vmem>>, vector<16x3xbf16>,
    %34 = vector.extract_strided_slice %1 {offsets = [10, 0, 0], sizes = [1, 16, 3], strides = [1, 1, 1]} : vector<16x16x3xbf16> to vector<1x16x3xbf16>
    %35 = vector.shape_cast %34 : vector<1x16x3xbf16> to vector<16x3xbf16>
    %c218 = arith.constant 218 : index
    %c0_15 = arith.constant 0 : index
    %36 = vector.load %arg5[%c218, %c0_15] : memref<362x3xbf16, #tpu.memory_space<vmem>>, vector<16x3xbf16>
    tpu.vector_store %arg5[%c218, %c0_15], %35 {strides = array<i32>} : memref<362x3xbf16, #tpu.memory_space<vmem>>, vector<16x3xbf16>,
    %37 = vector.extract_strided_slice %1 {offsets = [11, 0, 0], sizes = [1, 16, 3], strides = [1, 1, 1]} : vector<16x16x3xbf16> to vector<1x16x3xbf16>
    %38 = vector.shape_cast %37 : vector<1x16x3xbf16> to vector<16x3xbf16>
    %c236 = arith.constant 236 : index
    %c0_16 = arith.constant 0 : index
    %39 = vector.load %arg5[%c236, %c0_16] : memref<362x3xbf16, #tpu.memory_space<vmem>>, vector<16x3xbf16>
    tpu.vector_store %arg5[%c236, %c0_16], %38 {strides = array<i32>} : memref<362x3xbf16, #tpu.memory_space<vmem>>, vector<16x3xbf16>,
    %40 = vector.extract_strided_slice %1 {offsets = [12, 0, 0], sizes = [1, 16, 3], strides = [1, 1, 1]} : vector<16x16x3xbf16> to vector<1x16x3xbf16>
    %41 = vector.shape_cast %40 : vector<1x16x3xbf16> to vector<16x3xbf16>
    %c254 = arith.constant 254 : index
    %c0_17 = arith.constant 0 : index
    %42 = vector.load %arg5[%c254, %c0_17] : memref<362x3xbf16, #tpu.memory_space<vmem>>, vector<16x3xbf16>
    tpu.vector_store %arg5[%c254, %c0_17], %41 {strides = array<i32>} : memref<362x3xbf16, #tpu.memory_space<vmem>>, vector<16x3xbf16>,
    %43 = vector.extract_strided_slice %1 {offsets = [13, 0, 0], sizes = [1, 16, 3], strides = [1, 1, 1]} : vector<16x16x3xbf16> to vector<1x16x3xbf16>
    %44 = vector.shape_cast %43 : vector<1x16x3xbf16> to vector<16x3xbf16>
    %c272 = arith.constant 272 : index
    %c0_18 = arith.constant 0 : index
    %45 = vector.load %arg5[%c272, %c0_18] : memref<362x3xbf16, #tpu.memory_space<vmem>>, vector<16x3xbf16>
    tpu.vector_store %arg5[%c272, %c0_18], %44 {strides = array<i32>} : memref<362x3xbf16, #tpu.memory_space<vmem>>, vector<16x3xbf16>,
    %46 = vector.extract_strided_slice %1 {offsets = [14, 0, 0], sizes = [1, 16, 3], strides = [1, 1, 1]} : vector<16x16x3xbf16> to vector<1x16x3xbf16>
    %47 = vector.shape_cast %46 : vector<1x16x3xbf16> to vector<16x3xbf16>
    %c290 = arith.constant 290 : index
    %c0_19 = arith.constant 0 : index
    %48 = vector.load %arg5[%c290, %c0_19] : memref<362x3xbf16, #tpu.memory_space<vmem>>, vector<16x3xbf16>
    tpu.vector_store %arg5[%c290, %c0_19], %47 {strides = array<i32>} : memref<362x3xbf16, #tpu.memory_space<vmem>>, vector<16x3xbf16>,
    %49 = vector.extract_strided_slice %1 {offsets = [15, 0, 0], sizes = [1, 16, 3], strides = [1, 1, 1]} : vector<16x16x3xbf16> to vector<1x16x3xbf16>
    %50 = vector.shape_cast %49 : vector<1x16x3xbf16> to vector<16x3xbf16>
    %c308 = arith.constant 308 : index
    %c0_20 = arith.constant 0 : index
    %51 = vector.load %arg5[%c308, %c0_20] : memref<362x3xbf16, #tpu.memory_space<vmem>>, vector<16x3xbf16>
    tpu.vector_store %arg5[%c308, %c0_20], %50 {strides = array<i32>} : memref<362x3xbf16, #tpu.memory_space<vmem>>, vector<16x3xbf16>,
    %c0_21 = arith.constant 0 : index
    %c0_22 = arith.constant 0 : index
    %52 = vector.load %arg5[%c0_21, %c0_22] : memref<362x3xbf16, #tpu.memory_space<vmem>>, vector<324x3xbf16>
    %c1 = arith.constant 1 : index
    %c0_23 = arith.constant 0 : index
    %53 = vector.load %arg5[%c1, %c0_23] : memref<362x3xbf16, #tpu.memory_space<vmem>>, vector<324x3xbf16>
    %c2 = arith.constant 2 : index
    %c0_24 = arith.constant 0 : index
    %54 = vector.load %arg5[%c2, %c0_24] : memref<362x3xbf16, #tpu.memory_space<vmem>>, vector<324x3xbf16>
    %c18 = arith.constant 18 : index
    %c0_25 = arith.constant 0 : index
    %55 = vector.load %arg5[%c18, %c0_25] : memref<362x3xbf16, #tpu.memory_space<vmem>>, vector<324x3xbf16>
    %c19 = arith.constant 19 : index
    %c0_26 = arith.constant 0 : index
    %56 = vector.load %arg5[%c19, %c0_26] : memref<362x3xbf16, #tpu.memory_space<vmem>>, vector<324x3xbf16>
    %c20 = arith.constant 20 : index
    %c0_27 = arith.constant 0 : index
    %57 = vector.load %arg5[%c20, %c0_27] : memref<362x3xbf16, #tpu.memory_space<vmem>>, vector<324x3xbf16>
    %c36 = arith.constant 36 : index
    %c0_28 = arith.constant 0 : index
    %58 = vector.load %arg5[%c36, %c0_28] : memref<362x3xbf16, #tpu.memory_space<vmem>>, vector<324x3xbf16>
    %c37 = arith.constant 37 : index
    %c0_29 = arith.constant 0 : index
    %59 = vector.load %arg5[%c37, %c0_29] : memref<362x3xbf16, #tpu.memory_space<vmem>>, vector<324x3xbf16>
    %c38_30 = arith.constant 38 : index
    %c0_31 = arith.constant 0 : index
    %60 = vector.load %arg5[%c38_30, %c0_31] : memref<362x3xbf16, #tpu.memory_space<vmem>>, vector<324x3xbf16>
    %61 = tpu.concatenate %52, %53, %54, %55, %56, %57, %58, %59, %60 in 1 : vector<324x3xbf16>, vector<324x3xbf16>, vector<324x3xbf16>, vector<324x3xbf16>, vector<324x3xbf16>, vector<324x3xbf16>, vector<324x3xbf16>, vector<324x3xbf16>, vector<324x3xbf16> -> vector<324x27xbf16>
    %c0_32 = arith.constant 0 : index
    %c0_33 = arith.constant 0 : index
    %62 = vector.load %arg2[%c0_32, %c0_33] : memref<27x8xbf16, #tpu.memory_space<vmem>>, vector<27x8xbf16>
    %cst_34 = arith.constant dense<0.000000e+00> : vector<324x8xf32>
    %63 = tpu.matmul %61, %62, %cst_34 {dimension_numbers = #tpu.dot_dimension_numbers<[1], [0], [0], [1], [0, 0, 1, 1], [], []>} : vector<324x27xbf16>, vector<27x8xbf16>, vector<324x8xf32> -> vector<324x8xf32>
    %c0_35 = arith.constant 0 : index
    %c0_36 = arith.constant 0 : index
    %64 = vector.load %arg3[%c0_35, %c0_36] : memref<1x8xf32, #tpu.memory_space<vmem>>, vector<1x8xf32>
    %65 = vector.broadcast %64 : vector<1x8xf32> to vector<324x8xf32>
    %66 = arith.addf %63, %65 : vector<324x8xf32>
    %cst_37 = arith.constant 0.000000e+00 : f32
    %67 = vector.broadcast %cst_37 : f32 to vector<324x8xf32>
    %68 = arith.cmpf oge, %66, %67 : vector<324x8xf32>
    %cst_38 = arith.constant 2.000000e-01 : f32
    %69 = vector.broadcast %cst_38 : f32 to vector<324x8xf32>
    %70 = arith.mulf %69, %66 : vector<324x8xf32>
    %71 = arith.select %68, %66, %70 : vector<324x8xi1>, vector<324x8xf32>
    %72 = vector.extract_strided_slice %71 {offsets = [19, 0], sizes = [16, 8], strides = [1, 1]} : vector<324x8xf32> to vector<16x8xf32>
    %73 = arith.truncf %72 : vector<16x8xf32> to vector<16x8xbf16>
    %c0_39 = arith.constant 0 : index
    %c0_40 = arith.constant 0 : index
    %c0_41 = arith.constant 0 : index
    %c0_42 = arith.constant 0 : index
    %74 = vector.load %arg4[%c0_39, %c0_40, %c0_41, %c0_42] : memref<1x16x16x8xbf16, #tpu.memory_space<vmem>>, vector<1x1x16x8xbf16>
    %75 = vector.shape_cast %74 : vector<1x1x16x8xbf16> to vector<16x8xbf16>
    %76 = vector.shape_cast %73 : vector<16x8xbf16> to vector<1x1x16x8xbf16>
    tpu.vector_store %arg4[%c0_39, %c0_40, %c0_41, %c0_42], %76 {strides = array<i32>} : memref<1x16x16x8xbf16, #tpu.memory_space<vmem>>, vector<1x1x16x8xbf16>,
    %77 = vector.extract_strided_slice %71 {offsets = [37, 0], sizes = [16, 8], strides = [1, 1]} : vector<324x8xf32> to vector<16x8xf32>
    %78 = arith.truncf %77 : vector<16x8xf32> to vector<16x8xbf16>
    %c0_43 = arith.constant 0 : index
    %c1_44 = arith.constant 1 : index
    %c0_45 = arith.constant 0 : index
    %c0_46 = arith.constant 0 : index
    %79 = vector.load %arg4[%c0_43, %c1_44, %c0_45, %c0_46] : memref<1x16x16x8xbf16, #tpu.memory_space<vmem>>, vector<1x1x16x8xbf16>
    %80 = vector.shape_cast %79 : vector<1x1x16x8xbf16> to vector<16x8xbf16>
    %81 = vector.shape_cast %78 : vector<16x8xbf16> to vector<1x1x16x8xbf16>
    tpu.vector_store %arg4[%c0_43, %c1_44, %c0_45, %c0_46], %81 {strides = array<i32>} : memref<1x16x16x8xbf16, #tpu.memory_space<vmem>>, vector<1x1x16x8xbf16>,
    %82 = vector.extract_strided_slice %71 {offsets = [55, 0], sizes = [16, 8], strides = [1, 1]} : vector<324x8xf32> to vector<16x8xf32>
    %83 = arith.truncf %82 : vector<16x8xf32> to vector<16x8xbf16>
    %c0_47 = arith.constant 0 : index
    %c2_48 = arith.constant 2 : index
    %c0_49 = arith.constant 0 : index
    %c0_50 = arith.constant 0 : index
    %84 = vector.load %arg4[%c0_47, %c2_48, %c0_49, %c0_50] : memref<1x16x16x8xbf16, #tpu.memory_space<vmem>>, vector<1x1x16x8xbf16>
    %85 = vector.shape_cast %84 : vector<1x1x16x8xbf16> to vector<16x8xbf16>
    %86 = vector.shape_cast %83 : vector<16x8xbf16> to vector<1x1x16x8xbf16>
    tpu.vector_store %arg4[%c0_47, %c2_48, %c0_49, %c0_50], %86 {strides = array<i32>} : memref<1x16x16x8xbf16, #tpu.memory_space<vmem>>, vector<1x1x16x8xbf16>,
    %87 = vector.extract_strided_slice %71 {offsets = [73, 0], sizes = [16, 8], strides = [1, 1]} : vector<324x8xf32> to vector<16x8xf32>
    %88 = arith.truncf %87 : vector<16x8xf32> to vector<16x8xbf16>
    %c0_51 = arith.constant 0 : index
    %c3 = arith.constant 3 : index
    %c0_52 = arith.constant 0 : index
    %c0_53 = arith.constant 0 : index
    %89 = vector.load %arg4[%c0_51, %c3, %c0_52, %c0_53] : memref<1x16x16x8xbf16, #tpu.memory_space<vmem>>, vector<1x1x16x8xbf16>
    %90 = vector.shape_cast %89 : vector<1x1x16x8xbf16> to vector<16x8xbf16>
    %91 = vector.shape_cast %88 : vector<16x8xbf16> to vector<1x1x16x8xbf16>
    tpu.vector_store %arg4[%c0_51, %c3, %c0_52, %c0_53], %91 {strides = array<i32>} : memref<1x16x16x8xbf16, #tpu.memory_space<vmem>>, vector<1x1x16x8xbf16>,
    %92 = vector.extract_strided_slice %71 {offsets = [91, 0], sizes = [16, 8], strides = [1, 1]} : vector<324x8xf32> to vector<16x8xf32>
    %93 = arith.truncf %92 : vector<16x8xf32> to vector<16x8xbf16>
    %c0_54 = arith.constant 0 : index
    %c4 = arith.constant 4 : index
    %c0_55 = arith.constant 0 : index
    %c0_56 = arith.constant 0 : index
    %94 = vector.load %arg4[%c0_54, %c4, %c0_55, %c0_56] : memref<1x16x16x8xbf16, #tpu.memory_space<vmem>>, vector<1x1x16x8xbf16>
    %95 = vector.shape_cast %94 : vector<1x1x16x8xbf16> to vector<16x8xbf16>
    %96 = vector.shape_cast %93 : vector<16x8xbf16> to vector<1x1x16x8xbf16>
    tpu.vector_store %arg4[%c0_54, %c4, %c0_55, %c0_56], %96 {strides = array<i32>} : memref<1x16x16x8xbf16, #tpu.memory_space<vmem>>, vector<1x1x16x8xbf16>,
    %97 = vector.extract_strided_slice %71 {offsets = [109, 0], sizes = [16, 8], strides = [1, 1]} : vector<324x8xf32> to vector<16x8xf32>
    %98 = arith.truncf %97 : vector<16x8xf32> to vector<16x8xbf16>
    %c0_57 = arith.constant 0 : index
    %c5 = arith.constant 5 : index
    %c0_58 = arith.constant 0 : index
    %c0_59 = arith.constant 0 : index
    %99 = vector.load %arg4[%c0_57, %c5, %c0_58, %c0_59] : memref<1x16x16x8xbf16, #tpu.memory_space<vmem>>, vector<1x1x16x8xbf16>
    %100 = vector.shape_cast %99 : vector<1x1x16x8xbf16> to vector<16x8xbf16>
    %101 = vector.shape_cast %98 : vector<16x8xbf16> to vector<1x1x16x8xbf16>
    tpu.vector_store %arg4[%c0_57, %c5, %c0_58, %c0_59], %101 {strides = array<i32>} : memref<1x16x16x8xbf16, #tpu.memory_space<vmem>>, vector<1x1x16x8xbf16>,
    %102 = vector.extract_strided_slice %71 {offsets = [127, 0], sizes = [16, 8], strides = [1, 1]} : vector<324x8xf32> to vector<16x8xf32>
    %103 = arith.truncf %102 : vector<16x8xf32> to vector<16x8xbf16>
    %c0_60 = arith.constant 0 : index
    %c6 = arith.constant 6 : index
    %c0_61 = arith.constant 0 : index
    %c0_62 = arith.constant 0 : index
    %104 = vector.load %arg4[%c0_60, %c6, %c0_61, %c0_62] : memref<1x16x16x8xbf16, #tpu.memory_space<vmem>>, vector<1x1x16x8xbf16>
    %105 = vector.shape_cast %104 : vector<1x1x16x8xbf16> to vector<16x8xbf16>
    %106 = vector.shape_cast %103 : vector<16x8xbf16> to vector<1x1x16x8xbf16>
    tpu.vector_store %arg4[%c0_60, %c6, %c0_61, %c0_62], %106 {strides = array<i32>} : memref<1x16x16x8xbf16, #tpu.memory_space<vmem>>, vector<1x1x16x8xbf16>,
    %107 = vector.extract_strided_slice %71 {offsets = [145, 0], sizes = [16, 8], strides = [1, 1]} : vector<324x8xf32> to vector<16x8xf32>
    %108 = arith.truncf %107 : vector<16x8xf32> to vector<16x8xbf16>
    %c0_63 = arith.constant 0 : index
    %c7 = arith.constant 7 : index
    %c0_64 = arith.constant 0 : index
    %c0_65 = arith.constant 0 : index
    %109 = vector.load %arg4[%c0_63, %c7, %c0_64, %c0_65] : memref<1x16x16x8xbf16, #tpu.memory_space<vmem>>, vector<1x1x16x8xbf16>
    %110 = vector.shape_cast %109 : vector<1x1x16x8xbf16> to vector<16x8xbf16>
    %111 = vector.shape_cast %108 : vector<16x8xbf16> to vector<1x1x16x8xbf16>
    tpu.vector_store %arg4[%c0_63, %c7, %c0_64, %c0_65], %111 {strides = array<i32>} : memref<1x16x16x8xbf16, #tpu.memory_space<vmem>>, vector<1x1x16x8xbf16>,
    %112 = vector.extract_strided_slice %71 {offsets = [163, 0], sizes = [16, 8], strides = [1, 1]} : vector<324x8xf32> to vector<16x8xf32>
    %113 = arith.truncf %112 : vector<16x8xf32> to vector<16x8xbf16>
    %c0_66 = arith.constant 0 : index
    %c8 = arith.constant 8 : index
    %c0_67 = arith.constant 0 : index
    %c0_68 = arith.constant 0 : index
    %114 = vector.load %arg4[%c0_66, %c8, %c0_67, %c0_68] : memref<1x16x16x8xbf16, #tpu.memory_space<vmem>>, vector<1x1x16x8xbf16>
    %115 = vector.shape_cast %114 : vector<1x1x16x8xbf16> to vector<16x8xbf16>
    %116 = vector.shape_cast %113 : vector<16x8xbf16> to vector<1x1x16x8xbf16>
    tpu.vector_store %arg4[%c0_66, %c8, %c0_67, %c0_68], %116 {strides = array<i32>} : memref<1x16x16x8xbf16, #tpu.memory_space<vmem>>, vector<1x1x16x8xbf16>,
    %117 = vector.extract_strided_slice %71 {offsets = [181, 0], sizes = [16, 8], strides = [1, 1]} : vector<324x8xf32> to vector<16x8xf32>
    %118 = arith.truncf %117 : vector<16x8xf32> to vector<16x8xbf16>
    %c0_69 = arith.constant 0 : index
    %c9 = arith.constant 9 : index
    %c0_70 = arith.constant 0 : index
    %c0_71 = arith.constant 0 : index
    %119 = vector.load %arg4[%c0_69, %c9, %c0_70, %c0_71] : memref<1x16x16x8xbf16, #tpu.memory_space<vmem>>, vector<1x1x16x8xbf16>
    %120 = vector.shape_cast %119 : vector<1x1x16x8xbf16> to vector<16x8xbf16>
    %121 = vector.shape_cast %118 : vector<16x8xbf16> to vector<1x1x16x8xbf16>
    tpu.vector_store %arg4[%c0_69, %c9, %c0_70, %c0_71], %121 {strides = array<i32>} : memref<1x16x16x8xbf16, #tpu.memory_space<vmem>>, vector<1x1x16x8xbf16>,
    %122 = vector.extract_strided_slice %71 {offsets = [199, 0], sizes = [16, 8], strides = [1, 1]} : vector<324x8xf32> to vector<16x8xf32>
    %123 = arith.truncf %122 : vector<16x8xf32> to vector<16x8xbf16>
    %c0_72 = arith.constant 0 : index
    %c10 = arith.constant 10 : index
    %c0_73 = arith.constant 0 : index
    %c0_74 = arith.constant 0 : index
    %124 = vector.load %arg4[%c0_72, %c10, %c0_73, %c0_74] : memref<1x16x16x8xbf16, #tpu.memory_space<vmem>>, vector<1x1x16x8xbf16>
    %125 = vector.shape_cast %124 : vector<1x1x16x8xbf16> to vector<16x8xbf16>
    %126 = vector.shape_cast %123 : vector<16x8xbf16> to vector<1x1x16x8xbf16>
    tpu.vector_store %arg4[%c0_72, %c10, %c0_73, %c0_74], %126 {strides = array<i32>} : memref<1x16x16x8xbf16, #tpu.memory_space<vmem>>, vector<1x1x16x8xbf16>,
    %127 = vector.extract_strided_slice %71 {offsets = [217, 0], sizes = [16, 8], strides = [1, 1]} : vector<324x8xf32> to vector<16x8xf32>
    %128 = arith.truncf %127 : vector<16x8xf32> to vector<16x8xbf16>
    %c0_75 = arith.constant 0 : index
    %c11 = arith.constant 11 : index
    %c0_76 = arith.constant 0 : index
    %c0_77 = arith.constant 0 : index
    %129 = vector.load %arg4[%c0_75, %c11, %c0_76, %c0_77] : memref<1x16x16x8xbf16, #tpu.memory_space<vmem>>, vector<1x1x16x8xbf16>
    %130 = vector.shape_cast %129 : vector<1x1x16x8xbf16> to vector<16x8xbf16>
    %131 = vector.shape_cast %128 : vector<16x8xbf16> to vector<1x1x16x8xbf16>
    tpu.vector_store %arg4[%c0_75, %c11, %c0_76, %c0_77], %131 {strides = array<i32>} : memref<1x16x16x8xbf16, #tpu.memory_space<vmem>>, vector<1x1x16x8xbf16>,
    %132 = vector.extract_strided_slice %71 {offsets = [235, 0], sizes = [16, 8], strides = [1, 1]} : vector<324x8xf32> to vector<16x8xf32>
    %133 = arith.truncf %132 : vector<16x8xf32> to vector<16x8xbf16>
    %c0_78 = arith.constant 0 : index
    %c12 = arith.constant 12 : index
    %c0_79 = arith.constant 0 : index
    %c0_80 = arith.constant 0 : index
    %134 = vector.load %arg4[%c0_78, %c12, %c0_79, %c0_80] : memref<1x16x16x8xbf16, #tpu.memory_space<vmem>>, vector<1x1x16x8xbf16>
    %135 = vector.shape_cast %134 : vector<1x1x16x8xbf16> to vector<16x8xbf16>
    %136 = vector.shape_cast %133 : vector<16x8xbf16> to vector<1x1x16x8xbf16>
    tpu.vector_store %arg4[%c0_78, %c12, %c0_79, %c0_80], %136 {strides = array<i32>} : memref<1x16x16x8xbf16, #tpu.memory_space<vmem>>, vector<1x1x16x8xbf16>,
    %137 = vector.extract_strided_slice %71 {offsets = [253, 0], sizes = [16, 8], strides = [1, 1]} : vector<324x8xf32> to vector<16x8xf32>
    %138 = arith.truncf %137 : vector<16x8xf32> to vector<16x8xbf16>
    %c0_81 = arith.constant 0 : index
    %c13 = arith.constant 13 : index
    %c0_82 = arith.constant 0 : index
    %c0_83 = arith.constant 0 : index
    %139 = vector.load %arg4[%c0_81, %c13, %c0_82, %c0_83] : memref<1x16x16x8xbf16, #tpu.memory_space<vmem>>, vector<1x1x16x8xbf16>
    %140 = vector.shape_cast %139 : vector<1x1x16x8xbf16> to vector<16x8xbf16>
    %141 = vector.shape_cast %138 : vector<16x8xbf16> to vector<1x1x16x8xbf16>
    tpu.vector_store %arg4[%c0_81, %c13, %c0_82, %c0_83], %141 {strides = array<i32>} : memref<1x16x16x8xbf16, #tpu.memory_space<vmem>>, vector<1x1x16x8xbf16>,
    %142 = vector.extract_strided_slice %71 {offsets = [271, 0], sizes = [16, 8], strides = [1, 1]} : vector<324x8xf32> to vector<16x8xf32>
    %143 = arith.truncf %142 : vector<16x8xf32> to vector<16x8xbf16>
    %c0_84 = arith.constant 0 : index
    %c14 = arith.constant 14 : index
    %c0_85 = arith.constant 0 : index
    %c0_86 = arith.constant 0 : index
    %144 = vector.load %arg4[%c0_84, %c14, %c0_85, %c0_86] : memref<1x16x16x8xbf16, #tpu.memory_space<vmem>>, vector<1x1x16x8xbf16>
    %145 = vector.shape_cast %144 : vector<1x1x16x8xbf16> to vector<16x8xbf16>
    %146 = vector.shape_cast %143 : vector<16x8xbf16> to vector<1x1x16x8xbf16>
    tpu.vector_store %arg4[%c0_84, %c14, %c0_85, %c0_86], %146 {strides = array<i32>} : memref<1x16x16x8xbf16, #tpu.memory_space<vmem>>, vector<1x1x16x8xbf16>,
    %147 = vector.extract_strided_slice %71 {offsets = [289, 0], sizes = [16, 8], strides = [1, 1]} : vector<324x8xf32> to vector<16x8xf32>
    %148 = arith.truncf %147 : vector<16x8xf32> to vector<16x8xbf16>
    %c0_87 = arith.constant 0 : index
    %c15 = arith.constant 15 : index
    %c0_88 = arith.constant 0 : index
    %c0_89 = arith.constant 0 : index
    %149 = vector.load %arg4[%c0_87, %c15, %c0_88, %c0_89] : memref<1x16x16x8xbf16, #tpu.memory_space<vmem>>, vector<1x1x16x8xbf16>
    %150 = vector.shape_cast %149 : vector<1x1x16x8xbf16> to vector<16x8xbf16>
    %151 = vector.shape_cast %148 : vector<16x8xbf16> to vector<1x1x16x8xbf16>
    tpu.vector_store %arg4[%c0_87, %c15, %c0_88, %c0_89], %151 {strides = array<i32>} : memref<1x16x16x8xbf16, #tpu.memory_space<vmem>>, vector<1x1x16x8xbf16>,
    return
  }
  func.func @transform_0(%arg0: i32) -> (i32, i32, i32, i32) {
    %c0_i32 = arith.constant 0 : i32
    %c0_i32_0 = arith.constant 0 : i32
    %c0_i32_1 = arith.constant 0 : i32
    %c0_i32_2 = arith.constant 0 : i32
    return %arg0, %c0_i32, %c0_i32_0, %c0_i32_1 : i32, i32, i32, i32
  }
  func.func @transform_1(%arg0: i32) -> (i32, i32) {
    %c0_i32 = arith.constant 0 : i32
    %c0_i32_0 = arith.constant 0 : i32
    %c0_i32_1 = arith.constant 0 : i32
    return %c0_i32, %c0_i32_0 : i32, i32
  }
  func.func @transform_2(%arg0: i32) -> (i32, i32) {
    %c0_i32 = arith.constant 0 : i32
    %c0_i32_0 = arith.constant 0 : i32
    %c0_i32_1 = arith.constant 0 : i32
    return %c0_i32, %c0_i32_0 : i32, i32
  }
  func.func @transform_3(%arg0: i32) -> (i32, i32, i32, i32) {
    %c0_i32 = arith.constant 0 : i32
    %c0_i32_0 = arith.constant 0 : i32
    %c0_i32_1 = arith.constant 0 : i32
    %c0_i32_2 = arith.constant 0 : i32
    return %arg0, %c0_i32, %c0_i32_0, %c0_i32_1 : i32, i32, i32, i32
  }
}

</mosaic_0001>

<llo_original>
// kernel: tpu_custom_call.1
$region0: #{tpu_custom_call.1}
  #allocation0 [shape = 'u32[]', space=smem, size = 0x4, offset = 0x4, fixed_abs, tag = 'smem constant byte address 0x4 - core index']
  #allocation1 [shape = 'u32[144,128]{1,0:T(1,128)}', space=vmem, size = 0x12000, scoped, tag = 'internal scratch']
  #allocation2 [shape = 'bf16[362,3]{1,0:T(8,128)(2,1)}', space=vmem, size = 0x17000, scoped, tag = 'scratch operand']
  %s0 = inlined_call_operand.vmem [shape: bf16[2,16,16,3], index: 0, kind: input, shape index: {}]
  %s1 = inlined_call_operand.vmem [shape: bf16[27,8], index: 1, kind: input, shape index: {}]
  %s2 = inlined_call_operand.vmem [shape: f32[1,8], index: 2, kind: input, shape index: {}]
  %s3 = inlined_call_operand.vmem [shape: bf16[2,16,16,8], index: 3, kind: output, shape index: {}]
  %s4 = sld [smem:[#allocation0]]
  $region45: #{tpu_custom_call.1} parent=0
    _
  %s6 = ssub.s32 1, %s4
  %s7 = scalar_select 0, %s6, %s4
  loop: start=0, step=1, limit=4
  $region2: #{tpu_custom_call.1} parent=0 // loop_pre_header
    _
  $region3: #{tpu_custom_call.1} parent=0 // loop_header
    %s9 = sphi 0, %s13
    %p10 = scmp.ge.s32.totalorder %s9, 4
    %s19 = sphi 0, %s21
    %s22 = sphi 0, %s19
    %s23 = sphi 0, %s22
    %s39 = sphi 0, %s23
    %s43 = sphi 0, %s43
    %s45 = sphi 0, %s43
    %s46 = sphi 0, %s45
    %s60 = sphi 0, %s46
    %s64 = sphi 0, %s64
    %s66 = sphi 0, %s64
    %s67 = sphi 0, %s66
    %s81 = sphi 0, %s67
    %s87 = sphi 0, %s89
    %s90 = sphi 0, %s87
    %s91 = sphi 0, %s90
    %s107 = sphi 0, %s91
  $region4: #{tpu_custom_call.1} parent=0 // loop_header_branch
    %12 = sbr.rel (%p10) target = $region8
  $region5: #{tpu_custom_call.1} parent=0 // loop_body
    %s14 = ssub.s32 %s9, 1
    %s15 = ssub.s32 %s9, 2
    %s16 = sadd.s32 %s9, 1
    %s17 = ssub.s32 %s9, %s16
    %p18 = scmp.eq.s32.totalorder %s17, 0
    %s20 = sadd.s32 %s19, 1
    %s21 = scalar_select %p18, %s19, %s20
    %p24 = pneg %p18
    %p25 = scmp.eq.s32.totalorder %s9, 1
    %p26 = por %p24, %p25
    %p27 = scmp.ne.s32.totalorder %s19, %s22
    %p28 = scmp.eq.s32.totalorder %s9, 0
    %p29 = por %p27, %p28
    %p30 = scmp.ne.s32.totalorder %s19, %s22
    %p31 = scmp.eq.s32.totalorder %s14, 1
    %p32 = por %p30, %p31
    %p33 = scmp.ne.s32.totalorder %s22, %s23
    %p34 = scmp.eq.s32.totalorder %s14, 0
    %p35 = por %p33, %p34
    %p36 = scmp.ne.s32.totalorder %s22, %s23
    %p37 = scmp.eq.s32.totalorder %s15, 1
    %p38 = por %p36, %p37
    %p40 = scmp.ne.s32.totalorder %s23, %s39
    %p41 = scmp.eq.s32.totalorder %s15, 0
    %p42 = por %p40, %p41
    %s44 = sadd.s32 %s43, 1
    %p47 = scmp.eq.s32.totalorder %s9, 1
    %p48 = scmp.ne.s32.totalorder %s43, %s45
    %p49 = scmp.eq.s32.totalorder %s9, 0
    %p50 = por %p48, %p49
    %p51 = scmp.ne.s32.totalorder %s43, %s45
    %p52 = scmp.eq.s32.totalorder %s14, 1
    %p53 = por %p51, %p52
    %p54 = scmp.ne.s32.totalorder %s45, %s46
    %p55 = scmp.eq.s32.totalorder %s14, 0
    %p56 = por %p54, %p55
    %p57 = scmp.ne.s32.totalorder %s45, %s46
    %p58 = scmp.eq.s32.totalorder %s15, 1
    %p59 = por %p57, %p58
    %p61 = scmp.ne.s32.totalorder %s46, %s60
    %p62 = scmp.eq.s32.totalorder %s15, 0
    %p63 = por %p61, %p62
    %s65 = sadd.s32 %s64, 1
    %p68 = scmp.eq.s32.totalorder %s9, 1
    %p69 = scmp.ne.s32.totalorder %s64, %s66
    %p70 = scmp.eq.s32.totalorder %s9, 0
    %p71 = por %p69, %p70
    %p72 = scmp.ne.s32.totalorder %s64, %s66
    %p73 = scmp.eq.s32.totalorder %s14, 1
    %p74 = por %p72, %p73
    %p75 = scmp.ne.s32.totalorder %s66, %s67
    %p76 = scmp.eq.s32.totalorder %s14, 0
    %p77 = por %p75, %p76
    %p78 = scmp.ne.s32.totalorder %s66, %s67
    %p79 = scmp.eq.s32.totalorder %s15, 1
    %p80 = por %p78, %p79
    %p82 = scmp.ne.s32.totalorder %s67, %s81
    %p83 = scmp.eq.s32.totalorder %s15, 0
    %p84 = por %p82, %p83
    %s85 = ssub.s32 %s9, %s16
    %p86 = scmp.eq.s32.totalorder %s85, 0
    %s88 = sadd.s32 %s87, 1
    %s89 = scalar_select %p86, %s87, %s88
    %p92 = pneg %p86
    %p93 = scmp.eq.s32.totalorder %s9, 1
    %p94 = por %p92, %p93
    %p95 = scmp.ne.s32.totalorder %s87, %s90
    %p96 = scmp.eq.s32.totalorder %s9, 0
    %p97 = por %p95, %p96
    %p98 = scmp.ne.s32.totalorder %s87, %s90
    %p99 = scmp.eq.s32.totalorder %s14, 1
    %p100 = por %p98, %p99
    %p101 = scmp.ne.s32.totalorder %s90, %s91
    %p102 = scmp.eq.s32.totalorder %s14, 0
    %p103 = por %p101, %p102
    %p104 = scmp.ne.s32.totalorder %s90, %s91
    %p105 = scmp.eq.s32.totalorder %s15, 1
    %p106 = por %p104, %p105
    %p108 = scmp.ne.s32.totalorder %s91, %s107
    %p109 = scmp.eq.s32.totalorder %s15, 0
    %p110 = por %p108, %p109
    %p111 = scmp.le.s32.totalorder 1, %s9
    %p112 = scmp.lt.s32.totalorder %s9, 3
    %p113 = pnand %p111, %p112
    %p114 = pneg %p113
    // Predicated region
    $region9: #{tpu_custom_call.1} parent=5 // pred_check
      _
    $region10: #{tpu_custom_call.1} parent=5 // pred_check_branch
      %116 = sbr.rel (%p113) target = $region12
    $region11: #{tpu_custom_call.1} parent=5 // pred_region
      %s117 = ssub.s32 %s9, 1
      // Predicated region
      $region13: #{tpu_custom_call.1} parent=11 // pred_check
        %p118 = pneg %p56
      $region14: #{tpu_custom_call.1} parent=11 // pred_check_branch
        %120 = sbr.rel (%p118) target = $region16
      $region15: #{tpu_custom_call.1} parent=11 // pred_region
        _
      $region16: #{tpu_custom_call.1} parent=11 // pred_fallthru
        _
      // Predicated region
      $region17: #{tpu_custom_call.1} parent=11 // pred_check
        %p121 = pneg %p77
      $region18: #{tpu_custom_call.1} parent=11 // pred_check_branch
        %123 = sbr.rel (%p121) target = $region20
      $region19: #{tpu_custom_call.1} parent=11 // pred_region
        _
      $region20: #{tpu_custom_call.1} parent=11 // pred_fallthru
        _
    $region12: #{tpu_custom_call.1} parent=5 // pred_fallthru
      _
    %p124 = scmp.lt.s32.totalorder %s9, 2
    // Predicated region
    $region21: #{tpu_custom_call.1} parent=5 // pred_check
      %p125 = pneg %p124
    $region22: #{tpu_custom_call.1} parent=5 // pred_check_branch
      %127 = sbr.rel (%p125) target = $region24
    $region23: #{tpu_custom_call.1} parent=5 // pred_region
      // Predicated region
      $region25: #{tpu_custom_call.1} parent=23 // pred_check
        %p128 = pneg %p29
      $region26: #{tpu_custom_call.1} parent=23 // pred_check_branch
        %130 = sbr.rel (%p128) target = $region28
      $region27: #{tpu_custom_call.1} parent=23 // pred_region
        %p131 = scmp.lt.s32.totalorder %s9, 1
        %s132 = scalar_select %p131, %s9, 1
        %s133 = smul.addr %s132, 32
        %s134 = smul.addr %s133, 4
        %s135 = scalar_lea.vmem %s0, %s134
      $region28: #{tpu_custom_call.1} parent=23 // pred_fallthru
        _
    $region24: #{tpu_custom_call.1} parent=5 // pred_fallthru
      _
    %p136 = scmp.le.s32.totalorder 1, %s9
    %p137 = scmp.lt.s32.totalorder %s9, 3
    %p138 = pnand %p136, %p137
    %p139 = pneg %p138
    // Predicated region
    $region29: #{tpu_custom_call.1} parent=5 // pred_check
      _
    $region30: #{tpu_custom_call.1} parent=5 // pred_check_branch
      %141 = sbr.rel (%p138) target = $region32
    $region31: #{tpu_custom_call.1} parent=5 // pred_region
      %s142 = ssub.s32 %s9, 1
      %p143 = scmp.lt.s32.totalorder %s14, 1
      %s144 = scalar_select %p143, %s14, 1
      %s145 = smul.addr %s144, 32
      %s146 = smul.addr %s145, 4
      %s147 = scalar_lea.vmem %s0, %s146
      %p148 = pneg %p35
      %p149 = pneg %p32
      %p150 = pneg %p56
      %p151 = pneg %p53
      %p152 = pneg %p77
      %p153 = pneg %p74
      %p154 = pneg %p103
      %p155 = pneg %p100
      %p156 = scmp.lt.s32.totalorder %s14, 1
      %s157 = scalar_select %p156, %s14, 1
      %s158 = smul.addr %s157, 32
      %s159 = smul.addr %s158, 4
      %s160 = scalar_lea.vmem %s3, %s159
      %p161 = scmp.lt.s32.totalorder %s14, 1
      %s162 = scalar_select %p161, %s14, 1
      %s163 = smul.addr %s162, 32
      %s164 = smul.addr %s163, 4
      %s165 = scalar_lea.vmem %s0, %s164
      %p166 = scmp.lt.s32.totalorder %s14, 1
      %s167 = scalar_select %p166, %s14, 1
      %s168 = smul.addr %s167, 32
      %s169 = smul.addr %s168, 4
      %s170 = scalar_lea.vmem %s3, %s169
      %v172 = vld [vmem:[%s165] sm:$0xf]
      %v173 = vld [vmem:[%s165 + $0x4] sm:$0xf]
      %v174 = vld [vmem:[%s165 + $0x8] sm:$0xf]
      %v175 = vld [vmem:[%s165 + $0xc] sm:$0xf]
      %v176 = vld [vmem:[%s165 + $0x10] sm:$0xf]
      %v177 = vld [vmem:[%s165 + $0x14] sm:$0xf]
      %v178 = vld [vmem:[%s165 + $0x18] sm:$0xf]
      %v179 = vld [vmem:[%s165 + $0x1c] sm:$0xf]
      %v180 = vld [vmem:[%s165 + $0x20] sm:$0xf]
      %v181 = vld [vmem:[%s165 + $0x24] sm:$0xf]
      %v182 = vld [vmem:[%s165 + $0x28] sm:$0xf]
      %v183 = vld [vmem:[%s165 + $0x2c] sm:$0xf]
      %v184 = vld [vmem:[%s165 + $0x30] sm:$0xf]
      %v185 = vld [vmem:[%s165 + $0x34] sm:$0xf]
      %v186 = vld [vmem:[%s165 + $0x38] sm:$0xf]
      %v187 = vld [vmem:[%s165 + $0x3c] sm:$0xf]
      %v188 = vld [vmem:[%s165 + $0x40] sm:$0xf]
      %v189 = vld [vmem:[%s165 + $0x44] sm:$0xf]
      %v190 = vld [vmem:[%s165 + $0x48] sm:$0xf]
      %v191 = vld [vmem:[%s165 + $0x4c] sm:$0xf]
      %v192 = vld [vmem:[%s165 + $0x50] sm:$0xf]
      %v193 = vld [vmem:[%s165 + $0x54] sm:$0xf]
      %v194 = vld [vmem:[%s165 + $0x58] sm:$0xf]
      %v195 = vld [vmem:[%s165 + $0x5c] sm:$0xf]
      %v196 = vld [vmem:[%s165 + $0x60] sm:$0xf]
      %v197 = vld [vmem:[%s165 + $0x64] sm:$0xf]
      %v198 = vld [vmem:[%s165 + $0x68] sm:$0xf]
      %v199 = vld [vmem:[%s165 + $0x6c] sm:$0xf]
      %v200 = vld [vmem:[%s165 + $0x70] sm:$0xf]
      %v201 = vld [vmem:[%s165 + $0x74] sm:$0xf]
      %v202 = vld [vmem:[%s165 + $0x78] sm:$0xf]
      %v203 = vld [vmem:[%s165 + $0x7c] sm:$0xf]
      %vm204 = vcmask 19456
      %205 = vst.msk [vmem:[#allocation2] sm:$0xf] %vm204, 0
      %206 = vst.msk [vmem:[#allocation2 + $0x4] sm:$0xf] %vm204, 0
      %207 = vst.msk [vmem:[#allocation2 + $0x8] sm:$0xf] %vm204, 0
      %208 = vst.msk [vmem:[#allocation2 + $0xc] sm:$0xf] %vm204, 0
      %209 = vst.msk [vmem:[#allocation2 + $0x10] sm:$0xf] %vm204, 0
      %210 = vst.msk [vmem:[#allocation2 + $0x14] sm:$0xf] %vm204, 0
      %211 = vst.msk [vmem:[#allocation2 + $0x18] sm:$0xf] %vm204, 0
      %212 = vst.msk [vmem:[#allocation2 + $0x1c] sm:$0xf] %vm204, 0
      %213 = vst.msk [vmem:[#allocation2 + $0x20] sm:$0xf] %vm204, 0
      %214 = vst.msk [vmem:[#allocation2 + $0x24] sm:$0xf] %vm204, 0
      %215 = vst.msk [vmem:[#allocation2 + $0x28] sm:$0xf] %vm204, 0
      %216 = vst.msk [vmem:[#allocation2 + $0x2c] sm:$0xf] %vm204, 0
      %217 = vst.msk [vmem:[#allocation2 + $0x30] sm:$0xf] %vm204, 0
      %218 = vst.msk [vmem:[#allocation2 + $0x34] sm:$0xf] %vm204, 0
      %219 = vst.msk [vmem:[#allocation2 + $0x38] sm:$0xf] %vm204, 0
      %220 = vst.msk [vmem:[#allocation2 + $0x3c] sm:$0xf] %vm204, 0
      %221 = vst.msk [vmem:[#allocation2 + $0x40] sm:$0xf] %vm204, 0
      %222 = vst.msk [vmem:[#allocation2 + $0x44] sm:$0xf] %vm204, 0
      %223 = vst.msk [vmem:[#allocation2 + $0x48] sm:$0xf] %vm204, 0
      %224 = vst.msk [vmem:[#allocation2 + $0x4c] sm:$0xf] %vm204, 0
      %225 = vst.msk [vmem:[#allocation2 + $0x50] sm:$0xf] %vm204, 0
      %226 = vst.msk [vmem:[#allocation2 + $0x54] sm:$0xf] %vm204, 0
      %227 = vst.msk [vmem:[#allocation2 + $0x58] sm:$0xf] %vm204, 0
      %228 = vst.msk [vmem:[#allocation2 + $0x5c] sm:$0xf] %vm204, 0
      %229 = vst.msk [vmem:[#allocation2 + $0x60] sm:$0xf] %vm204, 0
      %230 = vst.msk [vmem:[#allocation2 + $0x64] sm:$0xf] %vm204, 0
      %231 = vst.msk [vmem:[#allocation2 + $0x68] sm:$0xf] %vm204, 0
      %232 = vst.msk [vmem:[#allocation2 + $0x6c] sm:$0xf] %vm204, 0
      %233 = vst.msk [vmem:[#allocation2 + $0x70] sm:$0xf] %vm204, 0
      %234 = vst.msk [vmem:[#allocation2 + $0x74] sm:$0xf] %vm204, 0
      %235 = vst.msk [vmem:[#allocation2 + $0x78] sm:$0xf] %vm204, 0
      %236 = vst.msk [vmem:[#allocation2 + $0x7c] sm:$0xf] %vm204, 0
      %237 = vst.msk [vmem:[#allocation2 + $0x80] sm:$0xf] %vm204, 0
      %238 = vst.msk [vmem:[#allocation2 + $0x84] sm:$0xf] %vm204, 0
      %239 = vst.msk [vmem:[#allocation2 + $0x88] sm:$0xf] %vm204, 0
      %240 = vst.msk [vmem:[#allocation2 + $0x8c] sm:$0xf] %vm204, 0
      %241 = vst.msk [vmem:[#allocation2 + $0x90] sm:$0xf] %vm204, 0
      %242 = vst.msk [vmem:[#allocation2 + $0x94] sm:$0xf] %vm204, 0
      %243 = vst.msk [vmem:[#allocation2 + $0x98] sm:$0xf] %vm204, 0
      %244 = vst.msk [vmem:[#allocation2 + $0x9c] sm:$0xf] %vm204, 0
      %245 = vst.msk [vmem:[#allocation2 + $0xa0] sm:$0xf] %vm204, 0
      %246 = vst.msk [vmem:[#allocation2 + $0xa4] sm:$0xf] %vm204, 0
      %247 = vst.msk [vmem:[#allocation2 + $0xa8] sm:$0xf] %vm204, 0
      %248 = vst.msk [vmem:[#allocation2 + $0xac] sm:$0xf] %vm204, 0
      %249 = vst.msk [vmem:[#allocation2 + $0xb0] sm:$0xf] %vm204, 0
      %vm250 = vcmask 16384
      %251 = vst.msk [vmem:[#allocation2 + $0xb4] sm:$0x1] %vm250, 0
      %vm254 = vcmask 1042432
      %vm255 = vcmask 1046532
      %vm256 = vmor %vm254, %vm255
      %v257 = vrot.slane %v172, 5
      %v258 = vrot.slane %v257, 4
      %v259 = vrot.slane %v173, 5
      %v260 = vsel %vm256, %v258, %v259
      %v261 = vrot.slane %v259, 4
      %vm265 = vcmask 19459
      %266 = vst.msk [vmem:[#allocation2 + $0x10] sm:$0x8] %vm265, %v257
      %267 = vst.msk [vmem:[#allocation2 + $0x14] sm:$0xf] %vm204, %v260
      %vm268 = vcmask 18432
      %269 = vst.msk [vmem:[#allocation2 + $0x18] sm:$0x7] %vm268, %v261
      %270 = vst.msk [vmem:[#allocation2 + $0x1c] sm:$0xf] %vm204, %v174
      %271 = vst.msk [vmem:[#allocation2 + $0x20] sm:$0xf] %vm204, %v175
      %vm274 = vcmask 1040384
      %vm275 = vcmask 1044484
      %vm276 = vmor %vm274, %vm275
      %v277 = vrot.slane %v176, 7
      %v278 = vrot.slane %v277, 4
      %v279 = vrot.slane %v177, 7
      %v280 = vsel %vm276, %v278, %v279
      %v281 = vrot.slane %v279, 4
      %vm285 = vcmask 19457
      %286 = vst.msk [vmem:[#allocation2 + $0x24] sm:$0xe] %vm285, %v277
      %287 = vst.msk [vmem:[#allocation2 + $0x28] sm:$0xf] %vm204, %v280
      %288 = vst.msk [vmem:[#allocation2 + $0x2c] sm:$0x1] %vm250, %v281
      %vm291 = vcmask 1041408
      %vm292 = vcmask 1045508
      %vm293 = vmor %vm291, %vm292
      %v294 = vrot.slane %v178, 6
      %v295 = vrot.slane %v294, 4
      %v296 = vrot.slane %v179, 6
      %v297 = vsel %vm293, %v295, %v296
      %v298 = vrot.slane %v296, 4
      %vm302 = vcmask 19458
      %303 = vst.msk [vmem:[#allocation2 + $0x2c] sm:$0xc] %vm302, %v294
      %304 = vst.msk [vmem:[#allocation2 + $0x30] sm:$0xf] %vm204, %v297
      %vm305 = vcmask 17408
      %306 = vst.msk [vmem:[#allocation2 + $0x34] sm:$0x3] %vm305, %v298
      %v309 = vrot.slane %v180, 5
      %v310 = vrot.slane %v309, 4
      %v311 = vrot.slane %v181, 5
      %v312 = vsel %vm256, %v310, %v311
      %v313 = vrot.slane %v311, 4
      %317 = vst.msk [vmem:[#allocation2 + $0x34] sm:$0x8] %vm265, %v309
      %318 = vst.msk [vmem:[#allocation2 + $0x38] sm:$0xf] %vm204, %v312
      %319 = vst.msk [vmem:[#allocation2 + $0x3c] sm:$0x7] %vm268, %v313
      %320 = vst.msk [vmem:[#allocation2 + $0x40] sm:$0xf] %vm204, %v182
      %321 = vst.msk [vmem:[#allocation2 + $0x44] sm:$0xf] %vm204, %v183
      %v324 = vrot.slane %v184, 7
      %v325 = vrot.slane %v324, 4
      %v326 = vrot.slane %v185, 7
      %v327 = vsel %vm276, %v325, %v326
      %v328 = vrot.slane %v326, 4
      %332 = vst.msk [vmem:[#allocation2 + $0x48] sm:$0xe] %vm285, %v324
      %333 = vst.msk [vmem:[#allocation2 + $0x4c] sm:$0xf] %vm204, %v327
      %334 = vst.msk [vmem:[#allocation2 + $0x50] sm:$0x1] %vm250, %v328
      %v337 = vrot.slane %v186, 6
      %v338 = vrot.slane %v337, 4
      %v339 = vrot.slane %v187, 6
      %v340 = vsel %vm293, %v338, %v339
      %v341 = vrot.slane %v339, 4
      %345 = vst.msk [vmem:[#allocation2 + $0x50] sm:$0xc] %vm302, %v337
      %346 = vst.msk [vmem:[#allocation2 + $0x54] sm:$0xf] %vm204, %v340
      %347 = vst.msk [vmem:[#allocation2 + $0x58] sm:$0x3] %vm305, %v341
      %v350 = vrot.slane %v188, 5
      %v351 = vrot.slane %v350, 4
      %v352 = vrot.slane %v189, 5
      %v353 = vsel %vm256, %v351, %v352
      %v354 = vrot.slane %v352, 4
      %358 = vst.msk [vmem:[#allocation2 + $0x58] sm:$0x8] %vm265, %v350
      %359 = vst.msk [vmem:[#allocation2 + $0x5c] sm:$0xf] %vm204, %v353
      %360 = vst.msk [vmem:[#allocation2 + $0x60] sm:$0x7] %vm268, %v354
      %361 = vst.msk [vmem:[#allocation2 + $0x64] sm:$0xf] %vm204, %v190
      %362 = vst.msk [vmem:[#allocation2 + $0x68] sm:$0xf] %vm204, %v191
      %v365 = vrot.slane %v192, 7
      %v366 = vrot.slane %v365, 4
      %v367 = vrot.slane %v193, 7
      %v368 = vsel %vm276, %v366, %v367
      %v369 = vrot.slane %v367, 4
      %373 = vst.msk [vmem:[#allocation2 + $0x6c] sm:$0xe] %vm285, %v365
      %374 = vst.msk [vmem:[#allocation2 + $0x70] sm:$0xf] %vm204, %v368
      %375 = vst.msk [vmem:[#allocation2 + $0x74] sm:$0x1] %vm250, %v369
      %v378 = vrot.slane %v194, 6
      %v379 = vrot.slane %v378, 4
      %v380 = vrot.slane %v195, 6
      %v381 = vsel %vm293, %v379, %v380
      %v382 = vrot.slane %v380, 4
      %386 = vst.msk [vmem:[#allocation2 + $0x74] sm:$0xc] %vm302, %v378
      %387 = vst.msk [vmem:[#allocation2 + $0x78] sm:$0xf] %vm204, %v381
      %388 = vst.msk [vmem:[#allocation2 + $0x7c] sm:$0x3] %vm305, %v382
      %v391 = vrot.slane %v196, 5
      %v392 = vrot.slane %v391, 4
      %v393 = vrot.slane %v197, 5
      %v394 = vsel %vm256, %v392, %v393
      %v395 = vrot.slane %v393, 4
      %399 = vst.msk [vmem:[#allocation2 + $0x7c] sm:$0x8] %vm265, %v391
      %400 = vst.msk [vmem:[#allocation2 + $0x80] sm:$0xf] %vm204, %v394
      %401 = vst.msk [vmem:[#allocation2 + $0x84] sm:$0x7] %vm268, %v395
      %402 = vst.msk [vmem:[#allocation2 + $0x88] sm:$0xf] %vm204, %v198
      %403 = vst.msk [vmem:[#allocation2 + $0x8c] sm:$0xf] %vm204, %v199
      %v406 = vrot.slane %v200, 7
      %v407 = vrot.slane %v406, 4
      %v408 = vrot.slane %v201, 7
      %v409 = vsel %vm276, %v407, %v408
      %v410 = vrot.slane %v408, 4
      %414 = vst.msk [vmem:[#allocation2 + $0x90] sm:$0xe] %vm285, %v406
      %415 = vst.msk [vmem:[#allocation2 + $0x94] sm:$0xf] %vm204, %v409
      %416 = vst.msk [vmem:[#allocation2 + $0x98] sm:$0x1] %vm250, %v410
      %v419 = vrot.slane %v202, 6
      %v420 = vrot.slane %v419, 4
      %v421 = vrot.slane %v203, 6
      %v422 = vsel %vm293, %v420, %v421
      %v423 = vrot.slane %v421, 4
      %427 = vst.msk [vmem:[#allocation2 + $0x98] sm:$0xc] %vm302, %v419
      %428 = vst.msk [vmem:[#allocation2 + $0x9c] sm:$0xf] %vm204, %v422
      %429 = vst.msk [vmem:[#allocation2 + $0xa0] sm:$0x3] %vm305, %v423
      %v430 = vld [vmem:[#allocation2] sm:$0xf]
      %v431 = vld [vmem:[#allocation2 + $0x4] sm:$0xf]
      %v432 = vld [vmem:[#allocation2 + $0x8] sm:$0xf]
      %v433 = vld [vmem:[#allocation2 + $0xc] sm:$0xf]
      %v434 = vld [vmem:[#allocation2 + $0x10] sm:$0xf]
      %v435 = vld [vmem:[#allocation2 + $0x14] sm:$0xf]
      %v436 = vld [vmem:[#allocation2 + $0x18] sm:$0xf]
      %v437 = vld [vmem:[#allocation2 + $0x1c] sm:$0xf]
      %v438 = vld [vmem:[#allocation2 + $0x20] sm:$0xf]
      %v439 = vld [vmem:[#allocation2 + $0x24] sm:$0xf]
      %v440 = vld [vmem:[#allocation2 + $0x28] sm:$0xf]
      %v441 = vld [vmem:[#allocation2 + $0x2c] sm:$0xf]
      %v442 = vld [vmem:[#allocation2 + $0x30] sm:$0xf]
      %v443 = vld [vmem:[#allocation2 + $0x34] sm:$0xf]
      %v444 = vld [vmem:[#allocation2 + $0x38] sm:$0xf]
      %v445 = vld [vmem:[#allocation2 + $0x3c] sm:$0xf]
      %v446 = vld [vmem:[#allocation2 + $0x40] sm:$0xf]
      %v447 = vld [vmem:[#allocation2 + $0x44] sm:$0xf]
      %v448 = vld [vmem:[#allocation2 + $0x48] sm:$0xf]
      %v449 = vld [vmem:[#allocation2 + $0x4c] sm:$0xf]
      %v450 = vld [vmem:[#allocation2 + $0x50] sm:$0xf]
      %v451 = vld [vmem:[#allocation2 + $0x54] sm:$0xf]
      %v452 = vld [vmem:[#allocation2 + $0x58] sm:$0xf]
      %v453 = vld [vmem:[#allocation2 + $0x5c] sm:$0xf]
      %v454 = vld [vmem:[#allocation2 + $0x60] sm:$0xf]
      %v455 = vld [vmem:[#allocation2 + $0x64] sm:$0xf]
      %v456 = vld [vmem:[#allocation2 + $0x68] sm:$0xf]
      %v457 = vld [vmem:[#allocation2 + $0x6c] sm:$0xf]
      %v458 = vld [vmem:[#allocation2 + $0x70] sm:$0xf]
      %v459 = vld [vmem:[#allocation2 + $0x74] sm:$0xf]
      %v460 = vld [vmem:[#allocation2 + $0x78] sm:$0xf]
      %v461 = vld [vmem:[#allocation2 + $0x7c] sm:$0xf]
      %v462 = vld [vmem:[#allocation2 + $0x80] sm:$0xf]
      %v463 = vld [vmem:[#allocation2 + $0x84] sm:$0xf]
      %v464 = vld [vmem:[#allocation2 + $0x88] sm:$0xf]
      %v465 = vld [vmem:[#allocation2 + $0x8c] sm:$0xf]
      %v466 = vld [vmem:[#allocation2 + $0x90] sm:$0xf]
      %v467 = vld [vmem:[#allocation2 + $0x94] sm:$0xf]
      %v468 = vld [vmem:[#allocation2 + $0x98] sm:$0xf]
      %v469 = vld [vmem:[#allocation2 + $0x9c] sm:$0xf]
      %v470 = vld [vmem:[#allocation2 + $0xa0] sm:$0x3]
      %v471 = vld [vmem:[#allocation2 + $0xa0] sm:$0x7]
      %v472 = vld [vmem:[#allocation2] sm:$0xe]
      %v473 = vld [vmem:[#allocation2 + $0x8] sm:$0xe]
      %v474 = vld [vmem:[#allocation2 + $0xa0] sm:$0xf]
      %v475 = vld [vmem:[#allocation2 + $0xa4] sm:$0xf]
      %v476 = vld [vmem:[#allocation2 + $0xa8] sm:$0x7]
      %v477 = vld [vmem:[#allocation2 + $0xa8] sm:$0xf]
      %v478 = vld [vmem:[#allocation2 + $0x8] sm:$0xc]
      %v479 = vld [vmem:[#allocation2 + $0x10] sm:$0xc]
      %v480 = vld [vmem:[#allocation2 + $0xac] sm:$0xf]
      %v481 = vld [vmem:[#allocation2 + $0xb0] sm:$0xf]
      %v482 = vld [vmem:[#allocation2 + $0xb4] sm:$0x1]
      %v483 = vld [vmem:[#allocation2 + $0x10] sm:$0x8]
      %v525 = vunpack.c.l.b16 %v430
      %v526 = vunpack.c.l.b16 %v431
      %v527 = vunpack.c.l.b16 %v432
      %v528 = vunpack.c.l.b16 %v433
      %v529 = vunpack.c.l.b16 %v434
      %v530 = vunpack.c.l.b16 %v435
      %v531 = vunpack.c.l.b16 %v436
      %v532 = vunpack.c.l.b16 %v437
      %v533 = vunpack.c.l.b16 %v438
      %v534 = vunpack.c.l.b16 %v439
      %v535 = vunpack.c.l.b16 %v440
      %v536 = vunpack.c.l.b16 %v441
      %v537 = vunpack.c.l.b16 %v442
      %v538 = vunpack.c.l.b16 %v443
      %v539 = vunpack.c.l.b16 %v444
      %v540 = vunpack.c.l.b16 %v445
      %v541 = vunpack.c.l.b16 %v446
      %v542 = vunpack.c.l.b16 %v447
      %v543 = vunpack.c.l.b16 %v448
      %v544 = vunpack.c.l.b16 %v449
      %v545 = vunpack.c.l.b16 %v450
      %v546 = vunpack.c.l.b16 %v451
      %v547 = vunpack.c.l.b16 %v452
      %v548 = vunpack.c.l.b16 %v453
      %v549 = vunpack.c.l.b16 %v454
      %v550 = vunpack.c.l.b16 %v455
      %v551 = vunpack.c.l.b16 %v456
      %v552 = vunpack.c.l.b16 %v457
      %v553 = vunpack.c.l.b16 %v458
      %v554 = vunpack.c.l.b16 %v459
      %v555 = vunpack.c.l.b16 %v460
      %v556 = vunpack.c.l.b16 %v461
      %v557 = vunpack.c.l.b16 %v462
      %v558 = vunpack.c.l.b16 %v463
      %v559 = vunpack.c.l.b16 %v464
      %v560 = vunpack.c.l.b16 %v465
      %v561 = vunpack.c.l.b16 %v466
      %v562 = vunpack.c.l.b16 %v467
      %v563 = vunpack.c.l.b16 %v468
      %v564 = vunpack.c.l.b16 %v469
      %v565 = vunpack.c.l.b16 %v470
      %v566 = vpack.c.b16 %v526, %v525
      %v567 = vpack.c.b16 %v528, %v527
      %v568 = vpack.c.b16 %v530, %v529
      %v569 = vpack.c.b16 %v532, %v531
      %v570 = vpack.c.b16 %v534, %v533
      %v571 = vpack.c.b16 %v536, %v535
      %v572 = vpack.c.b16 %v538, %v537
      %v573 = vpack.c.b16 %v540, %v539
      %v574 = vpack.c.b16 %v542, %v541
      %v575 = vpack.c.b16 %v544, %v543
      %v576 = vpack.c.b16 %v546, %v545
      %v577 = vpack.c.b16 %v548, %v547
      %v578 = vpack.c.b16 %v550, %v549
      %v579 = vpack.c.b16 %v552, %v551
      %v580 = vpack.c.b16 %v554, %v553
      %v581 = vpack.c.b16 %v556, %v555
      %v582 = vpack.c.b16 %v558, %v557
      %v583 = vpack.c.b16 %v560, %v559
      %v584 = vpack.c.b16 %v562, %v561
      %v585 = vpack.c.b16 %v564, %v563
      %v586 = vpack.c.b16 %v565, %v565
      %v588 = vunpack.c.l.b16 %v471
      %v589 = vpack.c.b16 %v588, %v588
      %vm590 = vsmask.f32 7424
      %v592 = vshrl.u32 %v566, 16
      %v594 = vshll.u32 %v566, 16
      %v596 = vrot.slane %v594, 1
      %v597 = vor.u32 %v592, %v596
      %v599 = vshll.u32 %v567, 16
      %v601 = vrot.slane %v599, 1
      %v602 = vsel %vm590, %v597, %v601
      %v603 = vshrl.u32 %v567, 16
      %v605 = vor.u32 %v603, %v601
      %v607 = vshll.u32 %v568, 16
      %v609 = vrot.slane %v607, 1
      %v610 = vsel %vm590, %v605, %v609
      %v611 = vshrl.u32 %v568, 16
      %v613 = vor.u32 %v611, %v609
      %v615 = vshll.u32 %v569, 16
      %v617 = vrot.slane %v615, 1
      %v618 = vsel %vm590, %v613, %v617
      %v619 = vshrl.u32 %v569, 16
      %v621 = vor.u32 %v619, %v617
      %v623 = vshll.u32 %v570, 16
      %v625 = vrot.slane %v623, 1
      %v626 = vsel %vm590, %v621, %v625
      %v627 = vshrl.u32 %v570, 16
      %v629 = vor.u32 %v627, %v625
      %v631 = vshll.u32 %v571, 16
      %v633 = vrot.slane %v631, 1
      %v634 = vsel %vm590, %v629, %v633
      %v635 = vshrl.u32 %v571, 16
      %v637 = vor.u32 %v635, %v633
      %v639 = vshll.u32 %v572, 16
      %v641 = vrot.slane %v639, 1
      %v642 = vsel %vm590, %v637, %v641
      %v643 = vshrl.u32 %v572, 16
      %v645 = vor.u32 %v643, %v641
      %v647 = vshll.u32 %v573, 16
      %v649 = vrot.slane %v647, 1
      %v650 = vsel %vm590, %v645, %v649
      %v651 = vshrl.u32 %v573, 16
      %v653 = vor.u32 %v651, %v649
      %v655 = vshll.u32 %v574, 16
      %v657 = vrot.slane %v655, 1
      %v658 = vsel %vm590, %v653, %v657
      %v659 = vshrl.u32 %v574, 16
      %v661 = vor.u32 %v659, %v657
      %v663 = vshll.u32 %v575, 16
      %v665 = vrot.slane %v663, 1
      %v666 = vsel %vm590, %v661, %v665
      %v667 = vshrl.u32 %v575, 16
      %v669 = vor.u32 %v667, %v665
      %v671 = vshll.u32 %v576, 16
      %v673 = vrot.slane %v671, 1
      %v674 = vsel %vm590, %v669, %v673
      %v675 = vshrl.u32 %v576, 16
      %v677 = vor.u32 %v675, %v673
      %v679 = vshll.u32 %v577, 16
      %v681 = vrot.slane %v679, 1
      %v682 = vsel %vm590, %v677, %v681
      %v683 = vshrl.u32 %v577, 16
      %v685 = vor.u32 %v683, %v681
      %v687 = vshll.u32 %v578, 16
      %v689 = vrot.slane %v687, 1
      %v690 = vsel %vm590, %v685, %v689
      %v691 = vshrl.u32 %v578, 16
      %v693 = vor.u32 %v691, %v689
      %v695 = vshll.u32 %v579, 16
      %v697 = vrot.slane %v695, 1
      %v698 = vsel %vm590, %v693, %v697
      %v699 = vshrl.u32 %v579, 16
      %v701 = vor.u32 %v699, %v697
      %v703 = vshll.u32 %v580, 16
      %v705 = vrot.slane %v703, 1
      %v706 = vsel %vm590, %v701, %v705
      %v707 = vshrl.u32 %v580, 16
      %v709 = vor.u32 %v707, %v705
      %v711 = vshll.u32 %v581, 16
      %v713 = vrot.slane %v711, 1
      %v714 = vsel %vm590, %v709, %v713
      %v715 = vshrl.u32 %v581, 16
      %v717 = vor.u32 %v715, %v713
      %v719 = vshll.u32 %v582, 16
      %v721 = vrot.slane %v719, 1
      %v722 = vsel %vm590, %v717, %v721
      %v723 = vshrl.u32 %v582, 16
      %v725 = vor.u32 %v723, %v721
      %v727 = vshll.u32 %v583, 16
      %v729 = vrot.slane %v727, 1
      %v730 = vsel %vm590, %v725, %v729
      %v731 = vshrl.u32 %v583, 16
      %v733 = vor.u32 %v731, %v729
      %v735 = vshll.u32 %v584, 16
      %v737 = vrot.slane %v735, 1
      %v738 = vsel %vm590, %v733, %v737
      %v739 = vshrl.u32 %v584, 16
      %v741 = vor.u32 %v739, %v737
      %v743 = vshll.u32 %v585, 16
      %v745 = vrot.slane %v743, 1
      %v746 = vsel %vm590, %v741, %v745
      %v747 = vshrl.u32 %v585, 16
      %v749 = vor.u32 %v747, %v745
      %v751 = vshll.u32 %v589, 16
      %v753 = vrot.slane %v751, 1
      %v754 = vsel %vm590, %v749, %v753
      %v755 = vshrl.u32 %v589, 16
      %v757 = vor.u32 %v755, %v753
      %758 = vrot.lane.b32.xlu0 %v602, 3
      %v759 = vpop.permute.xlu0 %758
      %760 = vrot.lane.b32.xlu0 %v610, 3
      %v761 = vpop.permute.xlu0 %760
      %762 = vrot.lane.b32.xlu0 %v618, 3
      %v763 = vpop.permute.xlu0 %762
      %764 = vrot.lane.b32.xlu0 %v626, 3
      %v765 = vpop.permute.xlu0 %764
      %766 = vrot.lane.b32.xlu0 %v634, 3
      %v767 = vpop.permute.xlu0 %766
      %768 = vrot.lane.b32.xlu0 %v642, 3
      %v769 = vpop.permute.xlu0 %768
      %770 = vrot.lane.b32.xlu0 %v650, 3
      %v771 = vpop.permute.xlu0 %770
      %772 = vrot.lane.b32.xlu0 %v658, 3
      %v773 = vpop.permute.xlu0 %772
      %774 = vrot.lane.b32.xlu0 %v666, 3
      %v775 = vpop.permute.xlu0 %774
      %776 = vrot.lane.b32.xlu0 %v674, 3
      %v777 = vpop.permute.xlu0 %776
      %778 = vrot.lane.b32.xlu0 %v682, 3
      %v779 = vpop.permute.xlu0 %778
      %780 = vrot.lane.b32.xlu0 %v690, 3
      %v781 = vpop.permute.xlu0 %780
      %782 = vrot.lane.b32.xlu0 %v698, 3
      %v783 = vpop.permute.xlu0 %782
      %784 = vrot.lane.b32.xlu0 %v706, 3
      %v785 = vpop.permute.xlu0 %784
      %786 = vrot.lane.b32.xlu0 %v714, 3
      %v787 = vpop.permute.xlu0 %786
      %788 = vrot.lane.b32.xlu0 %v722, 3
      %v789 = vpop.permute.xlu0 %788
      %790 = vrot.lane.b32.xlu0 %v730, 3
      %v791 = vpop.permute.xlu0 %790
      %792 = vrot.lane.b32.xlu0 %v738, 3
      %v793 = vpop.permute.xlu0 %792
      %794 = vrot.lane.b32.xlu0 %v746, 3
      %v795 = vpop.permute.xlu0 %794
      %796 = vrot.lane.b32.xlu0 %v754, 3
      %v797 = vpop.permute.xlu0 %796
      %798 = vrot.lane.b32.xlu0 %v757, 3
      %v799 = vpop.permute.xlu0 %798
      %v801 = vunpack.c.l.b16 %v472
      %v802 = vpack.c.b16 %v526, %v801
      %vm803 = vcmask 1046528
      %v804 = vrot.slane %v802, 1
      %v805 = vrot.slane %v567, 1
      %v806 = vsel %vm803, %v804, %v805
      %v807 = vrot.slane %v568, 1
      %v808 = vsel %vm803, %v805, %v807
      %v809 = vrot.slane %v569, 1
      %v810 = vsel %vm803, %v807, %v809
      %v811 = vrot.slane %v570, 1
      %v812 = vsel %vm803, %v809, %v811
      %v813 = vrot.slane %v571, 1
      %v814 = vsel %vm803, %v811, %v813
      %v815 = vrot.slane %v572, 1
      %v816 = vsel %vm803, %v813, %v815
      %v817 = vrot.slane %v573, 1
      %v818 = vsel %vm803, %v815, %v817
      %v819 = vrot.slane %v574, 1
      %v820 = vsel %vm803, %v817, %v819
      %v821 = vrot.slane %v575, 1
      %v822 = vsel %vm803, %v819, %v821
      %v823 = vrot.slane %v576, 1
      %v824 = vsel %vm803, %v821, %v823
      %v825 = vrot.slane %v577, 1
      %v826 = vsel %vm803, %v823, %v825
      %v827 = vrot.slane %v578, 1
      %v828 = vsel %vm803, %v825, %v827
      %v829 = vrot.slane %v579, 1
      %v830 = vsel %vm803, %v827, %v829
      %v831 = vrot.slane %v580, 1
      %v832 = vsel %vm803, %v829, %v831
      %v833 = vrot.slane %v581, 1
      %v834 = vsel %vm803, %v831, %v833
      %v835 = vrot.slane %v582, 1
      %v836 = vsel %vm803, %v833, %v835
      %v837 = vrot.slane %v583, 1
      %v838 = vsel %vm803, %v835, %v837
      %v839 = vrot.slane %v584, 1
      %v840 = vsel %vm803, %v837, %v839
      %v841 = vrot.slane %v585, 1
      %v842 = vsel %vm803, %v839, %v841
      %v843 = vrot.slane %v589, 1
      %v844 = vsel %vm803, %v841, %v843
      %845 = vrot.lane.b32.xlu0 %v806, 6
      %v846 = vpop.permute.xlu0 %845
      %847 = vrot.lane.b32.xlu0 %v808, 6
      %v848 = vpop.permute.xlu0 %847
      %849 = vrot.lane.b32.xlu0 %v810, 6
      %v850 = vpop.permute.xlu0 %849
      %851 = vrot.lane.b32.xlu0 %v812, 6
      %v852 = vpop.permute.xlu0 %851
      %853 = vrot.lane.b32.xlu0 %v814, 6
      %v854 = vpop.permute.xlu0 %853
      %855 = vrot.lane.b32.xlu0 %v816, 6
      %v856 = vpop.permute.xlu0 %855
      %857 = vrot.lane.b32.xlu0 %v818, 6
      %v858 = vpop.permute.xlu0 %857
      %859 = vrot.lane.b32.xlu0 %v820, 6
      %v860 = vpop.permute.xlu0 %859
      %861 = vrot.lane.b32.xlu0 %v822, 6
      %v862 = vpop.permute.xlu0 %861
      %863 = vrot.lane.b32.xlu0 %v824, 6
      %v864 = vpop.permute.xlu0 %863
      %865 = vrot.lane.b32.xlu0 %v826, 6
      %v866 = vpop.permute.xlu0 %865
      %867 = vrot.lane.b32.xlu0 %v828, 6
      %v868 = vpop.permute.xlu0 %867
      %869 = vrot.lane.b32.xlu0 %v830, 6
      %v870 = vpop.permute.xlu0 %869
      %871 = vrot.lane.b32.xlu0 %v832, 6
      %v872 = vpop.permute.xlu0 %871
      %873 = vrot.lane.b32.xlu0 %v834, 6
      %v874 = vpop.permute.xlu0 %873
      %875 = vrot.lane.b32.xlu0 %v836, 6
      %v876 = vpop.permute.xlu0 %875
      %877 = vrot.lane.b32.xlu0 %v838, 6
      %v878 = vpop.permute.xlu0 %877
      %879 = vrot.lane.b32.xlu0 %v840, 6
      %v880 = vpop.permute.xlu0 %879
      %881 = vrot.lane.b32.xlu0 %v842, 6
      %v882 = vpop.permute.xlu0 %881
      %883 = vrot.lane.b32.xlu0 %v844, 6
      %v884 = vpop.permute.xlu0 %883
      %885 = vrot.lane.b32.xlu0 %v843, 6
      %v886 = vpop.permute.xlu0 %885
      %v891 = vunpack.c.l.b16 %v473
      %v892 = vunpack.c.l.b16 %v474
      %v893 = vunpack.c.l.b16 %v475
      %v894 = vunpack.c.l.b16 %v476
      %v895 = vpack.c.b16 %v528, %v891
      %v896 = vpack.c.b16 %v893, %v892
      %v897 = vpack.c.b16 %v894, %v894
      %v898 = vrot.slane %v895, 1
      %v899 = vsel %vm803, %v898, %v807
      %v900 = vrot.slane %v896, 1
      %v901 = vsel %vm803, %v841, %v900
      %v902 = vrot.slane %v897, 1
      %v903 = vsel %vm803, %v900, %v902
      %904 = vrot.lane.b32.xlu0 %v899, 9
      %v905 = vpop.permute.xlu0 %904
      %906 = vrot.lane.b32.xlu0 %v810, 9
      %v907 = vpop.permute.xlu0 %906
      %908 = vrot.lane.b32.xlu0 %v812, 9
      %v909 = vpop.permute.xlu0 %908
      %910 = vrot.lane.b32.xlu0 %v814, 9
      %v911 = vpop.permute.xlu0 %910
      %912 = vrot.lane.b32.xlu0 %v816, 9
      %v913 = vpop.permute.xlu0 %912
      %914 = vrot.lane.b32.xlu0 %v818, 9
      %v915 = vpop.permute.xlu0 %914
      %916 = vrot.lane.b32.xlu0 %v820, 9
      %v917 = vpop.permute.xlu0 %916
      %918 = vrot.lane.b32.xlu0 %v822, 9
      %v919 = vpop.permute.xlu0 %918
      %920 = vrot.lane.b32.xlu0 %v824, 9
      %v921 = vpop.permute.xlu0 %920
      %922 = vrot.lane.b32.xlu0 %v826, 9
      %v923 = vpop.permute.xlu0 %922
      %924 = vrot.lane.b32.xlu0 %v828, 9
      %v925 = vpop.permute.xlu0 %924
      %926 = vrot.lane.b32.xlu0 %v830, 9
      %v927 = vpop.permute.xlu0 %926
      %928 = vrot.lane.b32.xlu0 %v832, 9
      %v929 = vpop.permute.xlu0 %928
      %930 = vrot.lane.b32.xlu0 %v834, 9
      %v931 = vpop.permute.xlu0 %930
      %932 = vrot.lane.b32.xlu0 %v836, 9
      %v933 = vpop.permute.xlu0 %932
      %934 = vrot.lane.b32.xlu0 %v838, 9
      %v935 = vpop.permute.xlu0 %934
      %936 = vrot.lane.b32.xlu0 %v840, 9
      %v937 = vpop.permute.xlu0 %936
      %938 = vrot.lane.b32.xlu0 %v842, 9
      %v939 = vpop.permute.xlu0 %938
      %940 = vrot.lane.b32.xlu0 %v901, 9
      %v941 = vpop.permute.xlu0 %940
      %942 = vrot.lane.b32.xlu0 %v903, 9
      %v943 = vpop.permute.xlu0 %942
      %944 = vrot.lane.b32.xlu0 %v902, 9
      %v945 = vpop.permute.xlu0 %944
      %v947 = vunpack.c.l.b16 %v477
      %v948 = vpack.c.b16 %v947, %v947
      %vm949 = vsmask.f32 6400
      %v951 = vshrl.u32 %v895, 16
      %v953 = vrot.slane %v951, 1
      %v954 = vshll.u32 %v895, 16
      %v956 = vrot.slane %v954, 2
      %v957 = vor.u32 %v953, %v956
      %v958 = vrot.slane %v611, 1
      %v959 = vrot.slane %v607, 2
      %v960 = vor.u32 %v958, %v959
      %v961 = vsel %vm949, %v957, %v960
      %v962 = vrot.slane %v619, 1
      %v963 = vrot.slane %v615, 2
      %v964 = vor.u32 %v962, %v963
      %v965 = vsel %vm949, %v960, %v964
      %v966 = vrot.slane %v627, 1
      %v967 = vrot.slane %v623, 2
      %v968 = vor.u32 %v966, %v967
      %v969 = vsel %vm949, %v964, %v968
      %v970 = vrot.slane %v635, 1
      %v971 = vrot.slane %v631, 2
      %v972 = vor.u32 %v970, %v971
      %v973 = vsel %vm949, %v968, %v972
      %v974 = vrot.slane %v643, 1
      %v975 = vrot.slane %v639, 2
      %v976 = vor.u32 %v974, %v975
      %v977 = vsel %vm949, %v972, %v976
      %v978 = vrot.slane %v651, 1
      %v979 = vrot.slane %v647, 2
      %v980 = vor.u32 %v978, %v979
      %v981 = vsel %vm949, %v976, %v980
      %v982 = vrot.slane %v659, 1
      %v983 = vrot.slane %v655, 2
      %v984 = vor.u32 %v982, %v983
      %v985 = vsel %vm949, %v980, %v984
      %v986 = vrot.slane %v667, 1
      %v987 = vrot.slane %v663, 2
      %v988 = vor.u32 %v986, %v987
      %v989 = vsel %vm949, %v984, %v988
      %v990 = vrot.slane %v675, 1
      %v991 = vrot.slane %v671, 2
      %v992 = vor.u32 %v990, %v991
      %v993 = vsel %vm949, %v988, %v992
      %v994 = vrot.slane %v683, 1
      %v995 = vrot.slane %v679, 2
      %v996 = vor.u32 %v994, %v995
      %v997 = vsel %vm949, %v992, %v996
      %v998 = vrot.slane %v691, 1
      %v999 = vrot.slane %v687, 2
      %v1000 = vor.u32 %v998, %v999
      %v1001 = vsel %vm949, %v996, %v1000
      %v1002 = vrot.slane %v699, 1
      %v1003 = vrot.slane %v695, 2
      %v1004 = vor.u32 %v1002, %v1003
      %v1005 = vsel %vm949, %v1000, %v1004
      %v1006 = vrot.slane %v707, 1
      %v1007 = vrot.slane %v703, 2
      %v1008 = vor.u32 %v1006, %v1007
      %v1009 = vsel %vm949, %v1004, %v1008
      %v1010 = vrot.slane %v715, 1
      %v1011 = vrot.slane %v711, 2
      %v1012 = vor.u32 %v1010, %v1011
      %v1013 = vsel %vm949, %v1008, %v1012
      %v1014 = vrot.slane %v723, 1
      %v1015 = vrot.slane %v719, 2
      %v1016 = vor.u32 %v1014, %v1015
      %v1017 = vsel %vm949, %v1012, %v1016
      %v1018 = vrot.slane %v731, 1
      %v1019 = vrot.slane %v727, 2
      %v1020 = vor.u32 %v1018, %v1019
      %v1021 = vsel %vm949, %v1016, %v1020
      %v1022 = vrot.slane %v739, 1
      %v1023 = vrot.slane %v735, 2
      %v1024 = vor.u32 %v1022, %v1023
      %v1025 = vsel %vm949, %v1020, %v1024
      %v1026 = vrot.slane %v747, 1
      %v1027 = vrot.slane %v743, 2
      %v1028 = vor.u32 %v1026, %v1027
      %v1029 = vsel %vm949, %v1024, %v1028
      %v1031 = vshrl.u32 %v896, 16
      %v1033 = vrot.slane %v1031, 1
      %v1034 = vshll.u32 %v896, 16
      %v1036 = vrot.slane %v1034, 2
      %v1037 = vor.u32 %v1033, %v1036
      %v1038 = vsel %vm949, %v1028, %v1037
      %v1040 = vshrl.u32 %v948, 16
      %v1042 = vrot.slane %v1040, 1
      %v1043 = vshll.u32 %v948, 16
      %v1045 = vrot.slane %v1043, 2
      %v1046 = vor.u32 %v1042, %v1045
      %v1047 = vsel %vm949, %v1037, %v1046
      %1048 = vrot.lane.b32.xlu0 %v961, 12
      %v1049 = vpop.permute.xlu0 %1048
      %1050 = vrot.lane.b32.xlu0 %v965, 12
      %v1051 = vpop.permute.xlu0 %1050
      %1052 = vrot.lane.b32.xlu0 %v969, 12
      %v1053 = vpop.permute.xlu0 %1052
      %1054 = vrot.lane.b32.xlu0 %v973, 12
      %v1055 = vpop.permute.xlu0 %1054
      %1056 = vrot.lane.b32.xlu0 %v977, 12
      %v1057 = vpop.permute.xlu0 %1056
      %1058 = vrot.lane.b32.xlu0 %v981, 12
      %v1059 = vpop.permute.xlu0 %1058
      %1060 = vrot.lane.b32.xlu0 %v985, 12
      %v1061 = vpop.permute.xlu0 %1060
      %1062 = vrot.lane.b32.xlu0 %v989, 12
      %v1063 = vpop.permute.xlu0 %1062
      %1064 = vrot.lane.b32.xlu0 %v993, 12
      %v1065 = vpop.permute.xlu0 %1064
      %1066 = vrot.lane.b32.xlu0 %v997, 12
      %v1067 = vpop.permute.xlu0 %1066
      %1068 = vrot.lane.b32.xlu0 %v1001, 12
      %v1069 = vpop.permute.xlu0 %1068
      %1070 = vrot.lane.b32.xlu0 %v1005, 12
      %v1071 = vpop.permute.xlu0 %1070
      %1072 = vrot.lane.b32.xlu0 %v1009, 12
      %v1073 = vpop.permute.xlu0 %1072
      %1074 = vrot.lane.b32.xlu0 %v1013, 12
      %v1075 = vpop.permute.xlu0 %1074
      %1076 = vrot.lane.b32.xlu0 %v1017, 12
      %v1077 = vpop.permute.xlu0 %1076
      %1078 = vrot.lane.b32.xlu0 %v1021, 12
      %v1079 = vpop.permute.xlu0 %1078
      %1080 = vrot.lane.b32.xlu0 %v1025, 12
      %v1081 = vpop.permute.xlu0 %1080
      %1082 = vrot.lane.b32.xlu0 %v1029, 12
      %v1083 = vpop.permute.xlu0 %1082
      %1084 = vrot.lane.b32.xlu0 %v1038, 12
      %v1085 = vpop.permute.xlu0 %1084
      %1086 = vrot.lane.b32.xlu0 %v1047, 12
      %v1087 = vpop.permute.xlu0 %1086
      %1088 = vrot.lane.b32.xlu0 %v1046, 12
      %v1089 = vpop.permute.xlu0 %1088
      %v1091 = vunpack.c.l.b16 %v478
      %v1092 = vpack.c.b16 %v528, %v1091
      %vm1093 = vcmask 1045504
      %v1094 = vrot.slane %v1092, 2
      %v1095 = vrot.slane %v568, 2
      %v1096 = vsel %vm1093, %v1094, %v1095
      %v1097 = vrot.slane %v569, 2
      %v1098 = vsel %vm1093, %v1095, %v1097
      %v1099 = vrot.slane %v570, 2
      %v1100 = vsel %vm1093, %v1097, %v1099
      %v1101 = vrot.slane %v571, 2
      %v1102 = vsel %vm1093, %v1099, %v1101
      %v1103 = vrot.slane %v572, 2
      %v1104 = vsel %vm1093, %v1101, %v1103
      %v1105 = vrot.slane %v573, 2
      %v1106 = vsel %vm1093, %v1103, %v1105
      %v1107 = vrot.slane %v574, 2
      %v1108 = vsel %vm1093, %v1105, %v1107
      %v1109 = vrot.slane %v575, 2
      %v1110 = vsel %vm1093, %v1107, %v1109
      %v1111 = vrot.slane %v576, 2
      %v1112 = vsel %vm1093, %v1109, %v1111
      %v1113 = vrot.slane %v577, 2
      %v1114 = vsel %vm1093, %v1111, %v1113
      %v1115 = vrot.slane %v578, 2
      %v1116 = vsel %vm1093, %v1113, %v1115
      %v1117 = vrot.slane %v579, 2
      %v1118 = vsel %vm1093, %v1115, %v1117
      %v1119 = vrot.slane %v580, 2
      %v1120 = vsel %vm1093, %v1117, %v1119
      %v1121 = vrot.slane %v581, 2
      %v1122 = vsel %vm1093, %v1119, %v1121
      %v1123 = vrot.slane %v582, 2
      %v1124 = vsel %vm1093, %v1121, %v1123
      %v1125 = vrot.slane %v583, 2
      %v1126 = vsel %vm1093, %v1123, %v1125
      %v1127 = vrot.slane %v584, 2
      %v1128 = vsel %vm1093, %v1125, %v1127
      %v1129 = vrot.slane %v585, 2
      %v1130 = vsel %vm1093, %v1127, %v1129
      %v1131 = vrot.slane %v896, 2
      %v1132 = vsel %vm1093, %v1129, %v1131
      %v1133 = vrot.slane %v948, 2
      %v1134 = vsel %vm1093, %v1131, %v1133
      %1135 = vrot.lane.b32.xlu0 %v1096, 15
      %v1136 = vpop.permute.xlu0 %1135
      %1137 = vrot.lane.b32.xlu0 %v1098, 15
      %v1138 = vpop.permute.xlu0 %1137
      %1139 = vrot.lane.b32.xlu0 %v1100, 15
      %v1140 = vpop.permute.xlu0 %1139
      %1141 = vrot.lane.b32.xlu0 %v1102, 15
      %v1142 = vpop.permute.xlu0 %1141
      %1143 = vrot.lane.b32.xlu0 %v1104, 15
      %v1144 = vpop.permute.xlu0 %1143
      %1145 = vrot.lane.b32.xlu0 %v1106, 15
      %v1146 = vpop.permute.xlu0 %1145
      %1147 = vrot.lane.b32.xlu0 %v1108, 15
      %v1148 = vpop.permute.xlu0 %1147
      %1149 = vrot.lane.b32.xlu0 %v1110, 15
      %v1150 = vpop.permute.xlu0 %1149
      %1151 = vrot.lane.b32.xlu0 %v1112, 15
      %v1152 = vpop.permute.xlu0 %1151
      %1153 = vrot.lane.b32.xlu0 %v1114, 15
      %v1154 = vpop.permute.xlu0 %1153
      %1155 = vrot.lane.b32.xlu0 %v1116, 15
      %v1156 = vpop.permute.xlu0 %1155
      %1157 = vrot.lane.b32.xlu0 %v1118, 15
      %v1158 = vpop.permute.xlu0 %1157
      %1159 = vrot.lane.b32.xlu0 %v1120, 15
      %v1160 = vpop.permute.xlu0 %1159
      %1161 = vrot.lane.b32.xlu0 %v1122, 15
      %v1162 = vpop.permute.xlu0 %1161
      %1163 = vrot.lane.b32.xlu0 %v1124, 15
      %v1164 = vpop.permute.xlu0 %1163
      %1165 = vrot.lane.b32.xlu0 %v1126, 15
      %v1166 = vpop.permute.xlu0 %1165
      %1167 = vrot.lane.b32.xlu0 %v1128, 15
      %v1168 = vpop.permute.xlu0 %1167
      %1169 = vrot.lane.b32.xlu0 %v1130, 15
      %v1170 = vpop.permute.xlu0 %1169
      %1171 = vrot.lane.b32.xlu0 %v1132, 15
      %v1172 = vpop.permute.xlu0 %1171
      %1173 = vrot.lane.b32.xlu0 %v1134, 15
      %v1174 = vpop.permute.xlu0 %1173
      %1175 = vrot.lane.b32.xlu0 %v1133, 15
      %v1176 = vpop.permute.xlu0 %1175
      %v1180 = vunpack.c.l.b16 %v479
      %v1181 = vunpack.c.l.b16 %v480
      %v1182 = vunpack.c.l.b16 %v481
      %v1183 = vpack.c.b16 %v530, %v1180
      %v1184 = vpack.c.b16 %v1181, %v947
      %v1185 = vpack.c.b16 %v1182, %v1182
      %v1186 = vrot.slane %v1183, 2
      %v1187 = vsel %vm1093, %v1186, %v1097
      %v1188 = vrot.slane %v1184, 2
      %v1189 = vsel %vm1093, %v1131, %v1188
      %v1190 = vrot.slane %v1185, 2
      %v1191 = vsel %vm1093, %v1188, %v1190
      %1192 = vrot.lane.b32.xlu0 %v1187, 18
      %v1193 = vpop.permute.xlu0 %1192
      %1194 = vrot.lane.b32.xlu0 %v1100, 18
      %v1195 = vpop.permute.xlu0 %1194
      %1196 = vrot.lane.b32.xlu0 %v1102, 18
      %v1197 = vpop.permute.xlu0 %1196
      %1198 = vrot.lane.b32.xlu0 %v1104, 18
      %v1199 = vpop.permute.xlu0 %1198
      %1200 = vrot.lane.b32.xlu0 %v1106, 18
      %v1201 = vpop.permute.xlu0 %1200
      %1202 = vrot.lane.b32.xlu0 %v1108, 18
      %v1203 = vpop.permute.xlu0 %1202
      %1204 = vrot.lane.b32.xlu0 %v1110, 18
      %v1205 = vpop.permute.xlu0 %1204
      %1206 = vrot.lane.b32.xlu0 %v1112, 18
      %v1207 = vpop.permute.xlu0 %1206
      %1208 = vrot.lane.b32.xlu0 %v1114, 18
      %v1209 = vpop.permute.xlu0 %1208
      %1210 = vrot.lane.b32.xlu0 %v1116, 18
      %v1211 = vpop.permute.xlu0 %1210
      %1212 = vrot.lane.b32.xlu0 %v1118, 18
      %v1213 = vpop.permute.xlu0 %1212
      %1214 = vrot.lane.b32.xlu0 %v1120, 18
      %v1215 = vpop.permute.xlu0 %1214
      %1216 = vrot.lane.b32.xlu0 %v1122, 18
      %v1217 = vpop.permute.xlu0 %1216
      %1218 = vrot.lane.b32.xlu0 %v1124, 18
      %v1219 = vpop.permute.xlu0 %1218
      %1220 = vrot.lane.b32.xlu0 %v1126, 18
      %v1221 = vpop.permute.xlu0 %1220
      %1222 = vrot.lane.b32.xlu0 %v1128, 18
      %v1223 = vpop.permute.xlu0 %1222
      %1224 = vrot.lane.b32.xlu0 %v1130, 18
      %v1225 = vpop.permute.xlu0 %1224
      %1226 = vrot.lane.b32.xlu0 %v1132, 18
      %v1227 = vpop.permute.xlu0 %1226
      %1228 = vrot.lane.b32.xlu0 %v1189, 18
      %v1229 = vpop.permute.xlu0 %1228
      %1230 = vrot.lane.b32.xlu0 %v1191, 18
      %v1231 = vpop.permute.xlu0 %1230
      %1232 = vrot.lane.b32.xlu0 %v1190, 18
      %v1233 = vpop.permute.xlu0 %1232
      %v1235 = vunpack.c.l.b16 %v482
      %v1236 = vpack.c.b16 %v1235, %v1182
      %vm1237 = vsmask.f32 5376
      %v1239 = vshrl.u32 %v1183, 16
      %v1241 = vrot.slane %v1239, 2
      %v1242 = vshll.u32 %v1183, 16
      %v1244 = vrot.slane %v1242, 3
      %v1245 = vor.u32 %v1241, %v1244
      %v1246 = vrot.slane %v619, 2
      %v1247 = vrot.slane %v615, 3
      %v1248 = vor.u32 %v1246, %v1247
      %v1249 = vsel %vm1237, %v1245, %v1248
      %v1250 = vrot.slane %v627, 2
      %v1251 = vrot.slane %v623, 3
      %v1252 = vor.u32 %v1250, %v1251
      %v1253 = vsel %vm1237, %v1248, %v1252
      %v1254 = vrot.slane %v635, 2
      %v1255 = vrot.slane %v631, 3
      %v1256 = vor.u32 %v1254, %v1255
      %v1257 = vsel %vm1237, %v1252, %v1256
      %v1258 = vrot.slane %v643, 2
      %v1259 = vrot.slane %v639, 3
      %v1260 = vor.u32 %v1258, %v1259
      %v1261 = vsel %vm1237, %v1256, %v1260
      %v1262 = vrot.slane %v651, 2
      %v1263 = vrot.slane %v647, 3
      %v1264 = vor.u32 %v1262, %v1263
      %v1265 = vsel %vm1237, %v1260, %v1264
      %v1266 = vrot.slane %v659, 2
      %v1267 = vrot.slane %v655, 3
      %v1268 = vor.u32 %v1266, %v1267
      %v1269 = vsel %vm1237, %v1264, %v1268
      %v1270 = vrot.slane %v667, 2
      %v1271 = vrot.slane %v663, 3
      %v1272 = vor.u32 %v1270, %v1271
      %v1273 = vsel %vm1237, %v1268, %v1272
      %v1274 = vrot.slane %v675, 2
      %v1275 = vrot.slane %v671, 3
      %v1276 = vor.u32 %v1274, %v1275
      %v1277 = vsel %vm1237, %v1272, %v1276
      %v1278 = vrot.slane %v683, 2
      %v1279 = vrot.slane %v679, 3
      %v1280 = vor.u32 %v1278, %v1279
      %v1281 = vsel %vm1237, %v1276, %v1280
      %v1282 = vrot.slane %v691, 2
      %v1283 = vrot.slane %v687, 3
      %v1284 = vor.u32 %v1282, %v1283
      %v1285 = vsel %vm1237, %v1280, %v1284
      %v1286 = vrot.slane %v699, 2
      %v1287 = vrot.slane %v695, 3
      %v1288 = vor.u32 %v1286, %v1287
      %v1289 = vsel %vm1237, %v1284, %v1288
      %v1290 = vrot.slane %v707, 2
      %v1291 = vrot.slane %v703, 3
      %v1292 = vor.u32 %v1290, %v1291
      %v1293 = vsel %vm1237, %v1288, %v1292
      %v1294 = vrot.slane %v715, 2
      %v1295 = vrot.slane %v711, 3
      %v1296 = vor.u32 %v1294, %v1295
      %v1297 = vsel %vm1237, %v1292, %v1296
      %v1298 = vrot.slane %v723, 2
      %v1299 = vrot.slane %v719, 3
      %v1300 = vor.u32 %v1298, %v1299
      %v1301 = vsel %vm1237, %v1296, %v1300
      %v1302 = vrot.slane %v731, 2
      %v1303 = vrot.slane %v727, 3
      %v1304 = vor.u32 %v1302, %v1303
      %v1305 = vsel %vm1237, %v1300, %v1304
      %v1306 = vrot.slane %v739, 2
      %v1307 = vrot.slane %v735, 3
      %v1308 = vor.u32 %v1306, %v1307
      %v1309 = vsel %vm1237, %v1304, %v1308
      %v1310 = vrot.slane %v747, 2
      %v1311 = vrot.slane %v743, 3
      %v1312 = vor.u32 %v1310, %v1311
      %v1313 = vsel %vm1237, %v1308, %v1312
      %v1314 = vrot.slane %v1031, 2
      %v1315 = vrot.slane %v1034, 3
      %v1316 = vor.u32 %v1314, %v1315
      %v1317 = vsel %vm1237, %v1312, %v1316
      %v1319 = vshrl.u32 %v1184, 16
      %v1321 = vrot.slane %v1319, 2
      %v1322 = vshll.u32 %v1184, 16
      %v1324 = vrot.slane %v1322, 3
      %v1325 = vor.u32 %v1321, %v1324
      %v1326 = vsel %vm1237, %v1316, %v1325
      %v1328 = vshrl.u32 %v1236, 16
      %v1330 = vrot.slane %v1328, 2
      %v1331 = vshll.u32 %v1236, 16
      %v1333 = vrot.slane %v1331, 3
      %v1334 = vor.u32 %v1330, %v1333
      %v1335 = vsel %vm1237, %v1325, %v1334
      %1336 = vrot.lane.b32.xlu0 %v1249, 21
      %v1337 = vpop.permute.xlu0 %1336
      %1338 = vrot.lane.b32.xlu0 %v1253, 21
      %v1339 = vpop.permute.xlu0 %1338
      %1340 = vrot.lane.b32.xlu0 %v1257, 21
      %v1341 = vpop.permute.xlu0 %1340
      %1342 = vrot.lane.b32.xlu0 %v1261, 21
      %v1343 = vpop.permute.xlu0 %1342
      %1344 = vrot.lane.b32.xlu0 %v1265, 21
      %v1345 = vpop.permute.xlu0 %1344
      %1346 = vrot.lane.b32.xlu0 %v1269, 21
      %v1347 = vpop.permute.xlu0 %1346
      %1348 = vrot.lane.b32.xlu0 %v1273, 21
      %v1349 = vpop.permute.xlu0 %1348
      %1350 = vrot.lane.b32.xlu0 %v1277, 21
      %v1351 = vpop.permute.xlu0 %1350
      %1352 = vrot.lane.b32.xlu0 %v1281, 21
      %v1353 = vpop.permute.xlu0 %1352
      %1354 = vrot.lane.b32.xlu0 %v1285, 21
      %v1355 = vpop.permute.xlu0 %1354
      %1356 = vrot.lane.b32.xlu0 %v1289, 21
      %v1357 = vpop.permute.xlu0 %1356
      %1358 = vrot.lane.b32.xlu0 %v1293, 21
      %v1359 = vpop.permute.xlu0 %1358
      %1360 = vrot.lane.b32.xlu0 %v1297, 21
      %v1361 = vpop.permute.xlu0 %1360
      %1362 = vrot.lane.b32.xlu0 %v1301, 21
      %v1363 = vpop.permute.xlu0 %1362
      %1364 = vrot.lane.b32.xlu0 %v1305, 21
      %v1365 = vpop.permute.xlu0 %1364
      %1366 = vrot.lane.b32.xlu0 %v1309, 21
      %v1367 = vpop.permute.xlu0 %1366
      %1368 = vrot.lane.b32.xlu0 %v1313, 21
      %v1369 = vpop.permute.xlu0 %1368
      %1370 = vrot.lane.b32.xlu0 %v1317, 21
      %v1371 = vpop.permute.xlu0 %1370
      %1372 = vrot.lane.b32.xlu0 %v1326, 21
      %v1373 = vpop.permute.xlu0 %1372
      %1374 = vrot.lane.b32.xlu0 %v1335, 21
      %v1375 = vpop.permute.xlu0 %1374
      %1376 = vrot.lane.b32.xlu0 %v1334, 21
      %v1377 = vpop.permute.xlu0 %1376
      %v1379 = vunpack.c.l.b16 %v483
      %v1380 = vpack.c.b16 %v530, %v1379
      %vm1381 = vcmask 1044480
      %v1382 = vrot.slane %v1380, 3
      %v1383 = vrot.slane %v569, 3
      %v1384 = vsel %vm1381, %v1382, %v1383
      %v1385 = vrot.slane %v570, 3
      %v1386 = vsel %vm1381, %v1383, %v1385
      %v1387 = vrot.slane %v571, 3
      %v1388 = vsel %vm1381, %v1385, %v1387
      %v1389 = vrot.slane %v572, 3
      %v1390 = vsel %vm1381, %v1387, %v1389
      %v1391 = vrot.slane %v573, 3
      %v1392 = vsel %vm1381, %v1389, %v1391
      %v1393 = vrot.slane %v574, 3
      %v1394 = vsel %vm1381, %v1391, %v1393
      %v1395 = vrot.slane %v575, 3
      %v1396 = vsel %vm1381, %v1393, %v1395
      %v1397 = vrot.slane %v576, 3
      %v1398 = vsel %vm1381, %v1395, %v1397
      %v1399 = vrot.slane %v577, 3
      %v1400 = vsel %vm1381, %v1397, %v1399
      %v1401 = vrot.slane %v578, 3
      %v1402 = vsel %vm1381, %v1399, %v1401
      %v1403 = vrot.slane %v579, 3
      %v1404 = vsel %vm1381, %v1401, %v1403
      %v1405 = vrot.slane %v580, 3
      %v1406 = vsel %vm1381, %v1403, %v1405
      %v1407 = vrot.slane %v581, 3
      %v1408 = vsel %vm1381, %v1405, %v1407
      %v1409 = vrot.slane %v582, 3
      %v1410 = vsel %vm1381, %v1407, %v1409
      %v1411 = vrot.slane %v583, 3
      %v1412 = vsel %vm1381, %v1409, %v1411
      %v1413 = vrot.slane %v584, 3
      %v1414 = vsel %vm1381, %v1411, %v1413
      %v1415 = vrot.slane %v585, 3
      %v1416 = vsel %vm1381, %v1413, %v1415
      %v1417 = vrot.slane %v896, 3
      %v1418 = vsel %vm1381, %v1415, %v1417
      %v1419 = vrot.slane %v1184, 3
      %v1420 = vsel %vm1381, %v1417, %v1419
      %v1421 = vrot.slane %v1236, 3
      %v1422 = vsel %vm1381, %v1419, %v1421
      %1423 = vrot.lane.b32.xlu0 %v1384, 24
      %v1424 = vpop.permute.xlu0 %1423
      %1425 = vrot.lane.b32.xlu0 %v1386, 24
      %v1426 = vpop.permute.xlu0 %1425
      %1427 = vrot.lane.b32.xlu0 %v1388, 24
      %v1428 = vpop.permute.xlu0 %1427
      %1429 = vrot.lane.b32.xlu0 %v1390, 24
      %v1430 = vpop.permute.xlu0 %1429
      %1431 = vrot.lane.b32.xlu0 %v1392, 24
      %v1432 = vpop.permute.xlu0 %1431
      %1433 = vrot.lane.b32.xlu0 %v1394, 24
      %v1434 = vpop.permute.xlu0 %1433
      %1435 = vrot.lane.b32.xlu0 %v1396, 24
      %v1436 = vpop.permute.xlu0 %1435
      %1437 = vrot.lane.b32.xlu0 %v1398, 24
      %v1438 = vpop.permute.xlu0 %1437
      %1439 = vrot.lane.b32.xlu0 %v1400, 24
      %v1440 = vpop.permute.xlu0 %1439
      %1441 = vrot.lane.b32.xlu0 %v1402, 24
      %v1442 = vpop.permute.xlu0 %1441
      %1443 = vrot.lane.b32.xlu0 %v1404, 24
      %v1444 = vpop.permute.xlu0 %1443
      %1445 = vrot.lane.b32.xlu0 %v1406, 24
      %v1446 = vpop.permute.xlu0 %1445
      %1447 = vrot.lane.b32.xlu0 %v1408, 24
      %v1448 = vpop.permute.xlu0 %1447
      %1449 = vrot.lane.b32.xlu0 %v1410, 24
      %v1450 = vpop.permute.xlu0 %1449
      %1451 = vrot.lane.b32.xlu0 %v1412, 24
      %v1452 = vpop.permute.xlu0 %1451
      %1453 = vrot.lane.b32.xlu0 %v1414, 24
      %v1454 = vpop.permute.xlu0 %1453
      %1455 = vrot.lane.b32.xlu0 %v1416, 24
      %v1456 = vpop.permute.xlu0 %1455
      %1457 = vrot.lane.b32.xlu0 %v1418, 24
      %v1458 = vpop.permute.xlu0 %1457
      %1459 = vrot.lane.b32.xlu0 %v1420, 24
      %v1460 = vpop.permute.xlu0 %1459
      %1461 = vrot.lane.b32.xlu0 %v1422, 24
      %v1462 = vpop.permute.xlu0 %1461
      %1463 = vrot.lane.b32.xlu0 %v1421, 24
      %v1464 = vpop.permute.xlu0 %1463
      %vm1465 = vcmask 23552
      %v1467 = vsel %vm1465, %v566, %v759
      %v1469 = vsel %vm1465, %v567, %v761
      %v1471 = vsel %vm1465, %v568, %v763
      %v1473 = vsel %vm1465, %v569, %v765
      %v1475 = vsel %vm1465, %v570, %v767
      %v1477 = vsel %vm1465, %v571, %v769
      %v1479 = vsel %vm1465, %v572, %v771
      %v1481 = vsel %vm1465, %v573, %v773
      %v1483 = vsel %vm1465, %v574, %v775
      %v1485 = vsel %vm1465, %v575, %v777
      %v1487 = vsel %vm1465, %v576, %v779
      %v1489 = vsel %vm1465, %v577, %v781
      %v1491 = vsel %vm1465, %v578, %v783
      %v1493 = vsel %vm1465, %v579, %v785
      %v1495 = vsel %vm1465, %v580, %v787
      %v1497 = vsel %vm1465, %v581, %v789
      %v1499 = vsel %vm1465, %v582, %v791
      %v1501 = vsel %vm1465, %v583, %v793
      %v1503 = vsel %vm1465, %v584, %v795
      %v1505 = vsel %vm1465, %v585, %v797
      %v1508 = vsel %vm1465, %v586, %v799
      %vm1509 = vcmask 48128
      %v1511 = vsel %vm1509, %v1467, %v846
      %v1513 = vsel %vm1509, %v1469, %v848
      %v1515 = vsel %vm1509, %v1471, %v850
      %v1517 = vsel %vm1509, %v1473, %v852
      %v1519 = vsel %vm1509, %v1475, %v854
      %v1521 = vsel %vm1509, %v1477, %v856
      %v1523 = vsel %vm1509, %v1479, %v858
      %v1525 = vsel %vm1509, %v1481, %v860
      %v1527 = vsel %vm1509, %v1483, %v862
      %v1529 = vsel %vm1509, %v1485, %v864
      %v1531 = vsel %vm1509, %v1487, %v866
      %v1533 = vsel %vm1509, %v1489, %v868
      %v1535 = vsel %vm1509, %v1491, %v870
      %v1537 = vsel %vm1509, %v1493, %v872
      %v1539 = vsel %vm1509, %v1495, %v874
      %v1541 = vsel %vm1509, %v1497, %v876
      %v1543 = vsel %vm1509, %v1499, %v878
      %v1545 = vsel %vm1509, %v1501, %v880
      %v1547 = vsel %vm1509, %v1503, %v882
      %v1549 = vsel %vm1509, %v1505, %v884
      %v1551 = vsel %vm1509, %v1508, %v886
      %vm1552 = vcmask 72704
      %v1554 = vsel %vm1552, %v1511, %v905
      %v1556 = vsel %vm1552, %v1513, %v907
      %v1558 = vsel %vm1552, %v1515, %v909
      %v1560 = vsel %vm1552, %v1517, %v911
      %v1562 = vsel %vm1552, %v1519, %v913
      %v1564 = vsel %vm1552, %v1521, %v915
      %v1566 = vsel %vm1552, %v1523, %v917
      %v1568 = vsel %vm1552, %v1525, %v919
      %v1570 = vsel %vm1552, %v1527, %v921
      %v1572 = vsel %vm1552, %v1529, %v923
      %v1574 = vsel %vm1552, %v1531, %v925
      %v1576 = vsel %vm1552, %v1533, %v927
      %v1578 = vsel %vm1552, %v1535, %v929
      %v1580 = vsel %vm1552, %v1537, %v931
      %v1582 = vsel %vm1552, %v1539, %v933
      %v1584 = vsel %vm1552, %v1541, %v935
      %v1586 = vsel %vm1552, %v1543, %v937
      %v1588 = vsel %vm1552, %v1545, %v939
      %v1590 = vsel %vm1552, %v1547, %v941
      %v1592 = vsel %vm1552, %v1549, %v943
      %v1594 = vsel %vm1552, %v1551, %v945
      %vm1595 = vcmask 97280
      %v1597 = vsel %vm1595, %v1554, %v1049
      %v1599 = vsel %vm1595, %v1556, %v1051
      %v1601 = vsel %vm1595, %v1558, %v1053
      %v1603 = vsel %vm1595, %v1560, %v1055
      %v1605 = vsel %vm1595, %v1562, %v1057
      %v1607 = vsel %vm1595, %v1564, %v1059
      %v1609 = vsel %vm1595, %v1566, %v1061
      %v1611 = vsel %vm1595, %v1568, %v1063
      %v1613 = vsel %vm1595, %v1570, %v1065
      %v1615 = vsel %vm1595, %v1572, %v1067
      %v1617 = vsel %vm1595, %v1574, %v1069
      %v1619 = vsel %vm1595, %v1576, %v1071
      %v1621 = vsel %vm1595, %v1578, %v1073
      %v1623 = vsel %vm1595, %v1580, %v1075
      %v1625 = vsel %vm1595, %v1582, %v1077
      %v1627 = vsel %vm1595, %v1584, %v1079
      %v1629 = vsel %vm1595, %v1586, %v1081
      %v1631 = vsel %vm1595, %v1588, %v1083
      %v1633 = vsel %vm1595, %v1590, %v1085
      %v1635 = vsel %vm1595, %v1592, %v1087
      %v1637 = vsel %vm1595, %v1594, %v1089
      %vm1638 = vcmask 121856
      %v1640 = vsel %vm1638, %v1597, %v1136
      %v1642 = vsel %vm1638, %v1599, %v1138
      %v1644 = vsel %vm1638, %v1601, %v1140
      %v1646 = vsel %vm1638, %v1603, %v1142
      %v1648 = vsel %vm1638, %v1605, %v1144
      %v1650 = vsel %vm1638, %v1607, %v1146
      %v1652 = vsel %vm1638, %v1609, %v1148
      %v1654 = vsel %vm1638, %v1611, %v1150
      %v1656 = vsel %vm1638, %v1613, %v1152
      %v1658 = vsel %vm1638, %v1615, %v1154
      %v1660 = vsel %vm1638, %v1617, %v1156
      %v1662 = vsel %vm1638, %v1619, %v1158
      %v1664 = vsel %vm1638, %v1621, %v1160
      %v1666 = vsel %vm1638, %v1623, %v1162
      %v1668 = vsel %vm1638, %v1625, %v1164
      %v1670 = vsel %vm1638, %v1627, %v1166
      %v1672 = vsel %vm1638, %v1629, %v1168
      %v1674 = vsel %vm1638, %v1631, %v1170
      %v1676 = vsel %vm1638, %v1633, %v1172
      %v1678 = vsel %vm1638, %v1635, %v1174
      %v1680 = vsel %vm1638, %v1637, %v1176
      %vm1681 = vcmask 146432
      %v1683 = vsel %vm1681, %v1640, %v1193
      %v1685 = vsel %vm1681, %v1642, %v1195
      %v1687 = vsel %vm1681, %v1644, %v1197
      %v1689 = vsel %vm1681, %v1646, %v1199
      %v1691 = vsel %vm1681, %v1648, %v1201
      %v1693 = vsel %vm1681, %v1650, %v1203
      %v1695 = vsel %vm1681, %v1652, %v1205
      %v1697 = vsel %vm1681, %v1654, %v1207
      %v1699 = vsel %vm1681, %v1656, %v1209
      %v1701 = vsel %vm1681, %v1658, %v1211
      %v1703 = vsel %vm1681, %v1660, %v1213
      %v1705 = vsel %vm1681, %v1662, %v1215
      %v1707 = vsel %vm1681, %v1664, %v1217
      %v1709 = vsel %vm1681, %v1666, %v1219
      %v1711 = vsel %vm1681, %v1668, %v1221
      %v1713 = vsel %vm1681, %v1670, %v1223
      %v1715 = vsel %vm1681, %v1672, %v1225
      %v1717 = vsel %vm1681, %v1674, %v1227
      %v1719 = vsel %vm1681, %v1676, %v1229
      %v1721 = vsel %vm1681, %v1678, %v1231
      %v1723 = vsel %vm1681, %v1680, %v1233
      %vm1724 = vcmask 171008
      %v1726 = vsel %vm1724, %v1683, %v1337
      %v1728 = vsel %vm1724, %v1685, %v1339
      %v1730 = vsel %vm1724, %v1687, %v1341
      %v1732 = vsel %vm1724, %v1689, %v1343
      %v1734 = vsel %vm1724, %v1691, %v1345
      %v1736 = vsel %vm1724, %v1693, %v1347
      %v1738 = vsel %vm1724, %v1695, %v1349
      %v1740 = vsel %vm1724, %v1697, %v1351
      %v1742 = vsel %vm1724, %v1699, %v1353
      %v1744 = vsel %vm1724, %v1701, %v1355
      %v1746 = vsel %vm1724, %v1703, %v1357
      %v1748 = vsel %vm1724, %v1705, %v1359
      %v1750 = vsel %vm1724, %v1707, %v1361
      %v1752 = vsel %vm1724, %v1709, %v1363
      %v1754 = vsel %vm1724, %v1711, %v1365
      %v1756 = vsel %vm1724, %v1713, %v1367
      %v1758 = vsel %vm1724, %v1715, %v1369
      %v1760 = vsel %vm1724, %v1717, %v1371
      %v1762 = vsel %vm1724, %v1719, %v1373
      %v1764 = vsel %vm1724, %v1721, %v1375
      %v1766 = vsel %vm1724, %v1723, %v1377
      %vm1767 = vcmask 195584
      %v1769 = vsel %vm1767, %v1726, %v1424
      %v1771 = vsel %vm1767, %v1728, %v1426
      %v1773 = vsel %vm1767, %v1730, %v1428
      %v1775 = vsel %vm1767, %v1732, %v1430
      %v1777 = vsel %vm1767, %v1734, %v1432
      %v1779 = vsel %vm1767, %v1736, %v1434
      %v1781 = vsel %vm1767, %v1738, %v1436
      %v1783 = vsel %vm1767, %v1740, %v1438
      %v1785 = vsel %vm1767, %v1742, %v1440
      %v1787 = vsel %vm1767, %v1744, %v1442
      %v1789 = vsel %vm1767, %v1746, %v1444
      %v1791 = vsel %vm1767, %v1748, %v1446
      %v1793 = vsel %vm1767, %v1750, %v1448
      %v1795 = vsel %vm1767, %v1752, %v1450
      %v1797 = vsel %vm1767, %v1754, %v1452
      %v1799 = vsel %vm1767, %v1756, %v1454
      %v1801 = vsel %vm1767, %v1758, %v1456
      %v1803 = vsel %vm1767, %v1760, %v1458
      %v1805 = vsel %vm1767, %v1762, %v1460
      %v1807 = vsel %vm1767, %v1764, %v1462
      %v1809 = vsel %vm1767, %v1766, %v1464
      %v1810 = vld [vmem:[%s1] sm:$0xf]
      %v1811 = vld [vmem:[%s1 + $0x4] sm:$0xf]
      %v1812 = vld [vmem:[%s1 + $0x8] sm:$0xf]
      %v1813 = vld [vmem:[%s1 + $0xc] sm:$0x3]
      %v1814 = vld [vmem:[%s2] sm:$0x1]
      %v1816 = vlaneseq
      %v1817 = vshrl.u32 %v1816, 7
      %v1818 = vsub.s32 0, %v1817
      %v1819 = vrot.slane %v1814, %v1818
      %v1825 = vunpack.c.l.b16 %v1810
      %v1826 = vunpack.c.l.b16 %v1811
      %v1827 = vunpack.c.l.b16 %v1812
      %v1828 = vunpack.c.l.b16 %v1813
      %v1829 = vpack.c.b16 %v1826, %v1825
      %v1830 = vpack.c.b16 %v1828, %v1827
      %vm1832 = vcmask 220160
      %v1833 = vsel %vm1832, %v1769, 0
      %v1835 = vsel %vm1832, %v1771, 0
      %v1837 = vsel %vm1832, %v1773, 0
      %v1839 = vsel %vm1832, %v1775, 0
      %v1841 = vsel %vm1832, %v1777, 0
      %v1843 = vsel %vm1832, %v1779, 0
      %v1845 = vsel %vm1832, %v1781, 0
      %v1847 = vsel %vm1832, %v1783, 0
      %v1849 = vsel %vm1832, %v1785, 0
      %v1851 = vsel %vm1832, %v1787, 0
      %v1853 = vsel %vm1832, %v1789, 0
      %v1855 = vsel %vm1832, %v1791, 0
      %v1857 = vsel %vm1832, %v1793, 0
      %v1859 = vsel %vm1832, %v1795, 0
      %v1861 = vsel %vm1832, %v1797, 0
      %v1863 = vsel %vm1832, %v1799, 0
      %v1865 = vsel %vm1832, %v1801, 0
      %v1867 = vsel %vm1832, %v1803, 0
      %v1869 = vsel %vm1832, %v1805, 0
      %v1871 = vsel %vm1832, %v1807, 0
      %v1873 = vsel %vm1832, %v1809, 0
      %vm1875 = vcmask 1044480
      %vm1876 = vcmask 1045504
      %v1877 = vsel %vm1875, 4294967295, 65535
      %v1878 = vsel %vm1876, %v1877, 0
      %v1880 = vand.u32 %v1830, %v1878
      %1882 = vmatprep.subr.bf16.mxu0 0
      %1883 = vmatpush1.bf16.msra.mxu0 %v1829
      %1884 = vmatprep.subr.bf16.mxu0 0
      %1885 = vmatpush1.bf16.msra.mxu0 %v1880
      %1886 = vmatprep.subr.bf16.mxu0 0
      %1887 = vmatpush1.bf16.msra.mxu0 0
      %1888 = vmatprep.subr.bf16.mxu0 0
      %1889 = vmatpush1.bf16.msra.mxu0 0
      %1890 = vmatprep.subr.bf16.mxu0 0
      %1891 = vmatpush1.bf16.msra.mxu0 0
      %1892 = vmatprep.subr.bf16.mxu0 0
      %1893 = vmatpush1.bf16.msra.mxu0 0
      %1894 = vmatprep.subr.bf16.mxu0 0
      %1895 = vmatpush1.bf16.msra.mxu0 0
      %1896 = vmatprep.subr.bf16.mxu0 0
      %1897 = vmatpush1.bf16.msra.mxu0 0
      %1898 = vmatprep.subr.bf16.mxu0 0
      %1899 = vmatpush1.bf16.msra.mxu0 0
      %1900 = vmatprep.subr.bf16.mxu0 0
      %1901 = vmatpush1.bf16.msra.mxu0 0
      %1902 = vmatprep.subr.bf16.mxu0 0
      %1903 = vmatpush1.bf16.msra.mxu0 0
      %1904 = vmatprep.subr.bf16.mxu0 0
      %1905 = vmatpush1.bf16.msra.mxu0 0
      %1906 = vmatprep.subr.bf16.mxu0 0
      %1907 = vmatpush1.bf16.msra.mxu0 0
      %1908 = vmatprep.subr.bf16.mxu0 0
      %1909 = vmatpush1.bf16.msra.mxu0 0
      %1910 = vmatprep.subr.bf16.mxu0 0
      %1911 = vmatpush1.bf16.msra.mxu0 0
      %1912 = vmatprep.subr.bf16.mxu0 0
      %1913 = vmatpush1.bf16.msra.mxu0 0
      %1914 = vmatprep.mubr.bf16.mxu0 0
      %1915 = vmatmul.mubr.bf16.gmra.mrb[0].mxu0 %v1833
      %v1916 = vpop.f32.mrb[0].mxu0
      %v1917 = vpop.f32.mrb[0].mxu0
      %v1918 = vpop.f32.mrb[0].mxu0
      %v1919 = vpop.f32.mrb[0].mxu0
      %1920 = vmatprep.mubr.bf16.mxu0 0
      %1921 = vmatmul.mubr.bf16.gmra.mrb[0].mxu0 %v1835
      %v1922 = vpop.f32.mrb[0].mxu0
      %v1923 = vadd.f32 %v1819, %v1922
      %v1924 = vpop.f32.mrb[0].mxu0
      %v1925 = vpop.f32.mrb[0].mxu0
      %v1926 = vadd.f32 %v1819, %v1925
      %v1927 = vpop.f32.mrb[0].mxu0
      %1928 = vmatprep.mubr.bf16.mxu0 0
      %1929 = vmatmul.mubr.bf16.gmra.mrb[0].mxu0 %v1837
      %v1930 = vpop.f32.mrb[0].mxu0
      %v1931 = vadd.f32 %v1819, %v1930
      %v1932 = vpop.f32.mrb[0].mxu0
      %v1933 = vpop.f32.mrb[0].mxu0
      %v1934 = vadd.f32 %v1819, %v1933
      %v1935 = vpop.f32.mrb[0].mxu0
      %1936 = vmatprep.mubr.bf16.mxu0 0
      %1937 = vmatmul.mubr.bf16.gmra.mrb[0].mxu0 %v1839
      %v1938 = vpop.f32.mrb[0].mxu0
      %v1939 = vadd.f32 %v1819, %v1938
      %v1940 = vpop.f32.mrb[0].mxu0
      %v1941 = vpop.f32.mrb[0].mxu0
      %v1942 = vadd.f32 %v1819, %v1941
      %v1943 = vpop.f32.mrb[0].mxu0
      %1944 = vmatprep.mubr.bf16.mxu0 0
      %1945 = vmatmul.mubr.bf16.gmra.mrb[0].mxu0 %v1841
      %v1946 = vpop.f32.mrb[0].mxu0
      %v1947 = vadd.f32 %v1819, %v1946
      %v1948 = vpop.f32.mrb[0].mxu0
      %v1949 = vpop.f32.mrb[0].mxu0
      %v1950 = vadd.f32 %v1819, %v1949
      %v1951 = vpop.f32.mrb[0].mxu0
      %1952 = vmatprep.mubr.bf16.mxu0 0
      %1953 = vmatmul.mubr.bf16.gmra.mrb[0].mxu0 %v1843
      %v1954 = vpop.f32.mrb[0].mxu0
      %v1955 = vadd.f32 %v1819, %v1954
      %v1956 = vpop.f32.mrb[0].mxu0
      %v1957 = vpop.f32.mrb[0].mxu0
      %v1958 = vadd.f32 %v1819, %v1957
      %v1959 = vpop.f32.mrb[0].mxu0
      %1960 = vmatprep.mubr.bf16.mxu0 0
      %1961 = vmatmul.mubr.bf16.gmra.mrb[0].mxu0 %v1845
      %v1962 = vpop.f32.mrb[0].mxu0
      %v1963 = vadd.f32 %v1819, %v1962
      %v1964 = vpop.f32.mrb[0].mxu0
      %v1965 = vpop.f32.mrb[0].mxu0
      %v1966 = vadd.f32 %v1819, %v1965
      %v1967 = vpop.f32.mrb[0].mxu0
      %1968 = vmatprep.mubr.bf16.mxu0 0
      %1969 = vmatmul.mubr.bf16.gmra.mrb[0].mxu0 %v1847
      %v1970 = vpop.f32.mrb[0].mxu0
      %v1971 = vadd.f32 %v1819, %v1970
      %v1972 = vpop.f32.mrb[0].mxu0
      %v1973 = vpop.f32.mrb[0].mxu0
      %v1974 = vadd.f32 %v1819, %v1973
      %v1975 = vpop.f32.mrb[0].mxu0
      %1976 = vmatprep.mubr.bf16.mxu0 0
      %1977 = vmatmul.mubr.bf16.gmra.mrb[0].mxu0 %v1849
      %v1978 = vpop.f32.mrb[0].mxu0
      %v1979 = vadd.f32 %v1819, %v1978
      %v1980 = vpop.f32.mrb[0].mxu0
      %v1981 = vpop.f32.mrb[0].mxu0
      %v1982 = vadd.f32 %v1819, %v1981
      %v1983 = vpop.f32.mrb[0].mxu0
      %1984 = vmatprep.mubr.bf16.mxu0 0
      %1985 = vmatmul.mubr.bf16.gmra.mrb[0].mxu0 %v1851
      %v1986 = vpop.f32.mrb[0].mxu0
      %v1987 = vadd.f32 %v1819, %v1986
      %v1988 = vpop.f32.mrb[0].mxu0
      %v1989 = vpop.f32.mrb[0].mxu0
      %v1990 = vadd.f32 %v1819, %v1989
      %v1991 = vpop.f32.mrb[0].mxu0
      %1992 = vmatprep.mubr.bf16.mxu0 0
      %1993 = vmatmul.mubr.bf16.gmra.mrb[0].mxu0 %v1853
      %v1994 = vpop.f32.mrb[0].mxu0
      %v1995 = vadd.f32 %v1819, %v1994
      %v1996 = vpop.f32.mrb[0].mxu0
      %v1997 = vpop.f32.mrb[0].mxu0
      %v1998 = vadd.f32 %v1819, %v1997
      %v1999 = vpop.f32.mrb[0].mxu0
      %2000 = vmatprep.mubr.bf16.mxu0 0
      %2001 = vmatmul.mubr.bf16.gmra.mrb[0].mxu0 %v1855
      %v2002 = vpop.f32.mrb[0].mxu0
      %v2003 = vadd.f32 %v1819, %v2002
      %v2004 = vpop.f32.mrb[0].mxu0
      %v2005 = vpop.f32.mrb[0].mxu0
      %v2006 = vadd.f32 %v1819, %v2005
      %v2007 = vpop.f32.mrb[0].mxu0
      %2008 = vmatprep.mubr.bf16.mxu0 0
      %2009 = vmatmul.mubr.bf16.gmra.mrb[0].mxu0 %v1857
      %v2010 = vpop.f32.mrb[0].mxu0
      %v2011 = vadd.f32 %v1819, %v2010
      %v2012 = vpop.f32.mrb[0].mxu0
      %v2013 = vpop.f32.mrb[0].mxu0
      %v2014 = vadd.f32 %v1819, %v2013
      %v2015 = vpop.f32.mrb[0].mxu0
      %2016 = vmatprep.mubr.bf16.mxu0 0
      %2017 = vmatmul.mubr.bf16.gmra.mrb[0].mxu0 %v1859
      %v2018 = vpop.f32.mrb[0].mxu0
      %v2019 = vadd.f32 %v1819, %v2018
      %v2020 = vpop.f32.mrb[0].mxu0
      %v2021 = vpop.f32.mrb[0].mxu0
      %v2022 = vadd.f32 %v1819, %v2021
      %v2023 = vpop.f32.mrb[0].mxu0
      %2024 = vmatprep.mubr.bf16.mxu0 0
      %2025 = vmatmul.mubr.bf16.gmra.mrb[0].mxu0 %v1861
      %v2026 = vpop.f32.mrb[0].mxu0
      %v2027 = vadd.f32 %v1819, %v2026
      %v2028 = vpop.f32.mrb[0].mxu0
      %v2029 = vpop.f32.mrb[0].mxu0
      %v2030 = vadd.f32 %v1819, %v2029
      %v2031 = vpop.f32.mrb[0].mxu0
      %2032 = vmatprep.mubr.bf16.mxu0 0
      %2033 = vmatmul.mubr.bf16.gmra.mrb[0].mxu0 %v1863
      %v2034 = vpop.f32.mrb[0].mxu0
      %v2035 = vadd.f32 %v1819, %v2034
      %v2036 = vpop.f32.mrb[0].mxu0
      %v2037 = vpop.f32.mrb[0].mxu0
      %v2038 = vadd.f32 %v1819, %v2037
      %v2039 = vpop.f32.mrb[0].mxu0
      %2040 = vmatprep.mubr.bf16.mxu0 0
      %2041 = vmatmul.mubr.bf16.gmra.mrb[0].mxu0 %v1865
      %v2042 = vpop.f32.mrb[0].mxu0
      %v2043 = vadd.f32 %v1819, %v2042
      %v2044 = vpop.f32.mrb[0].mxu0
      %v2045 = vpop.f32.mrb[0].mxu0
      %v2046 = vadd.f32 %v1819, %v2045
      %v2047 = vpop.f32.mrb[0].mxu0
      %2048 = vmatprep.mubr.bf16.mxu0 0
      %2049 = vmatmul.mubr.bf16.gmra.mrb[0].mxu0 %v1867
      %v2050 = vpop.f32.mrb[0].mxu0
      %v2051 = vadd.f32 %v1819, %v2050
      %v2052 = vpop.f32.mrb[0].mxu0
      %v2053 = vpop.f32.mrb[0].mxu0
      %v2054 = vadd.f32 %v1819, %v2053
      %v2055 = vpop.f32.mrb[0].mxu0
      %2056 = vmatprep.mubr.bf16.mxu0 0
      %2057 = vmatmul.mubr.bf16.gmra.mrb[0].mxu0 %v1869
      %v2058 = vpop.f32.mrb[0].mxu0
      %v2059 = vadd.f32 %v1819, %v2058
      %v2060 = vpop.f32.mrb[0].mxu0
      %v2061 = vpop.f32.mrb[0].mxu0
      %v2062 = vadd.f32 %v1819, %v2061
      %v2063 = vpop.f32.mrb[0].mxu0
      %2064 = vmatprep.mubr.bf16.mxu0 0
      %2065 = vmatmul.mubr.bf16.gmra.mrb[0].mxu0 %v1871
      %v2066 = vpop.f32.mrb[0].mxu0
      %v2067 = vadd.f32 %v1819, %v2066
      %v2068 = vpop.f32.mrb[0].mxu0
      %v2069 = vpop.f32.mrb[0].mxu0
      %v2070 = vpop.f32.mrb[0].mxu0
      %2071 = vmatprep.mubr.bf16.mxu0 0
      %2072 = vmatmul.mubr.bf16.gmra.mrb[0].mxu0 %v1873
      %v2073 = vpop.f32.mrb[0].mxu0
      %v2074 = vpop.f32.mrb[0].mxu0
      %v2075 = vpop.f32.mrb[0].mxu0
      %v2076 = vpop.f32.mrb[0].mxu0
      %2077 = vdwg.mxu0
      %vm2078 = vcmp.ge.f32.partialorder %v1923, 0.0
      %vm2079 = vcmp.ge.f32.partialorder %v1926, 0.0
      %vm2080 = vcmp.ge.f32.partialorder %v1931, 0.0
      %vm2081 = vcmp.ge.f32.partialorder %v1934, 0.0
      %vm2082 = vcmp.ge.f32.partialorder %v1939, 0.0
      %vm2083 = vcmp.ge.f32.partialorder %v1942, 0.0
      %vm2084 = vcmp.ge.f32.partialorder %v1947, 0.0
      %vm2085 = vcmp.ge.f32.partialorder %v1950, 0.0
      %vm2086 = vcmp.ge.f32.partialorder %v1955, 0.0
      %vm2087 = vcmp.ge.f32.partialorder %v1958, 0.0
      %vm2088 = vcmp.ge.f32.partialorder %v1963, 0.0
      %vm2089 = vcmp.ge.f32.partialorder %v1966, 0.0
      %vm2090 = vcmp.ge.f32.partialorder %v1971, 0.0
      %vm2091 = vcmp.ge.f32.partialorder %v1974, 0.0
      %vm2092 = vcmp.ge.f32.partialorder %v1979, 0.0
      %vm2093 = vcmp.ge.f32.partialorder %v1982, 0.0
      %vm2094 = vcmp.ge.f32.partialorder %v1987, 0.0
      %vm2095 = vcmp.ge.f32.partialorder %v1990, 0.0
      %vm2096 = vcmp.ge.f32.partialorder %v1995, 0.0
      %vm2097 = vcmp.ge.f32.partialorder %v1998, 0.0
      %vm2098 = vcmp.ge.f32.partialorder %v2003, 0.0
      %vm2099 = vcmp.ge.f32.partialorder %v2006, 0.0
      %vm2100 = vcmp.ge.f32.partialorder %v2011, 0.0
      %vm2101 = vcmp.ge.f32.partialorder %v2014, 0.0
      %vm2102 = vcmp.ge.f32.partialorder %v2019, 0.0
      %vm2103 = vcmp.ge.f32.partialorder %v2022, 0.0
      %vm2104 = vcmp.ge.f32.partialorder %v2027, 0.0
      %vm2105 = vcmp.ge.f32.partialorder %v2030, 0.0
      %vm2106 = vcmp.ge.f32.partialorder %v2035, 0.0
      %vm2107 = vcmp.ge.f32.partialorder %v2038, 0.0
      %vm2108 = vcmp.ge.f32.partialorder %v2043, 0.0
      %vm2109 = vcmp.ge.f32.partialorder %v2046, 0.0
      %vm2110 = vcmp.ge.f32.partialorder %v2051, 0.0
      %vm2111 = vcmp.ge.f32.partialorder %v2054, 0.0
      %vm2112 = vcmp.ge.f32.partialorder %v2059, 0.0
      %vm2113 = vcmp.ge.f32.partialorder %v2062, 0.0
      %vm2114 = vcmp.ge.f32.partialorder %v2067, 0.0
      %v2115 = vmul.f32 %v1923, 0.2
      %v2116 = vmul.f32 %v1926, 0.2
      %v2117 = vmul.f32 %v1931, 0.2
      %v2118 = vmul.f32 %v1934, 0.2
      %v2119 = vmul.f32 %v1939, 0.2
      %v2120 = vmul.f32 %v1942, 0.2
      %v2121 = vmul.f32 %v1947, 0.2
      %v2122 = vmul.f32 %v1950, 0.2
      %v2123 = vmul.f32 %v1955, 0.2
      %v2124 = vmul.f32 %v1958, 0.2
      %v2125 = vmul.f32 %v1963, 0.2
      %v2126 = vmul.f32 %v1966, 0.2
      %v2127 = vmul.f32 %v1971, 0.2
      %v2128 = vmul.f32 %v1974, 0.2
      %v2129 = vmul.f32 %v1979, 0.2
      %v2130 = vmul.f32 %v1982, 0.2
      %v2131 = vmul.f32 %v1987, 0.2
      %v2132 = vmul.f32 %v1990, 0.2
      %v2133 = vmul.f32 %v1995, 0.2
      %v2134 = vmul.f32 %v1998, 0.2
      %v2135 = vmul.f32 %v2003, 0.2
      %v2136 = vmul.f32 %v2006, 0.2
      %v2137 = vmul.f32 %v2011, 0.2
      %v2138 = vmul.f32 %v2014, 0.2
      %v2139 = vmul.f32 %v2019, 0.2
      %v2140 = vmul.f32 %v2022, 0.2
      %v2141 = vmul.f32 %v2027, 0.2
      %v2142 = vmul.f32 %v2030, 0.2
      %v2143 = vmul.f32 %v2035, 0.2
      %v2144 = vmul.f32 %v2038, 0.2
      %v2145 = vmul.f32 %v2043, 0.2
      %v2146 = vmul.f32 %v2046, 0.2
      %v2147 = vmul.f32 %v2051, 0.2
      %v2148 = vmul.f32 %v2054, 0.2
      %v2149 = vmul.f32 %v2059, 0.2
      %v2150 = vmul.f32 %v2062, 0.2
      %v2151 = vmul.f32 %v2067, 0.2
      %v2152 = vsel %vm2078, %v1923, %v2115
      %v2153 = vsel %vm2079, %v1926, %v2116
      %v2154 = vsel %vm2080, %v1931, %v2117
      %v2155 = vsel %vm2081, %v1934, %v2118
      %v2156 = vsel %vm2082, %v1939, %v2119
      %v2157 = vsel %vm2083, %v1942, %v2120
      %v2158 = vsel %vm2084, %v1947, %v2121
      %v2159 = vsel %vm2085, %v1950, %v2122
      %v2160 = vsel %vm2086, %v1955, %v2123
      %v2161 = vsel %vm2087, %v1958, %v2124
      %v2162 = vsel %vm2088, %v1963, %v2125
      %v2163 = vsel %vm2089, %v1966, %v2126
      %v2164 = vsel %vm2090, %v1971, %v2127
      %v2165 = vsel %vm2091, %v1974, %v2128
      %v2166 = vsel %vm2092, %v1979, %v2129
      %v2167 = vsel %vm2093, %v1982, %v2130
      %v2168 = vsel %vm2094, %v1987, %v2131
      %v2169 = vsel %vm2095, %v1990, %v2132
      %v2170 = vsel %vm2096, %v1995, %v2133
      %v2171 = vsel %vm2097, %v1998, %v2134
      %v2172 = vsel %vm2098, %v2003, %v2135
      %v2173 = vsel %vm2099, %v2006, %v2136
      %v2174 = vsel %vm2100, %v2011, %v2137
      %v2175 = vsel %vm2101, %v2014, %v2138
      %v2176 = vsel %vm2102, %v2019, %v2139
      %v2177 = vsel %vm2103, %v2022, %v2140
      %v2178 = vsel %vm2104, %v2027, %v2141
      %v2179 = vsel %vm2105, %v2030, %v2142
      %v2180 = vsel %vm2106, %v2035, %v2143
      %v2181 = vsel %vm2107, %v2038, %v2144
      %v2182 = vsel %vm2108, %v2043, %v2145
      %v2183 = vsel %vm2109, %v2046, %v2146
      %v2184 = vsel %vm2110, %v2051, %v2147
      %v2185 = vsel %vm2111, %v2054, %v2148
      %v2186 = vsel %vm2112, %v2059, %v2149
      %v2187 = vsel %vm2113, %v2062, %v2150
      %v2188 = vsel %vm2114, %v2067, %v2151
      %v2189 = vpack.c.bf16 %v2153, %v2152
      %v2190 = vpack.c.bf16 %v2154, %v2154
      %v2193 = vunpack.c.l.b16 %v2189
      %v2194 = vunpack.c.h.b16 %v2189
      %v2195 = vunpack.c.l.b16 %v2190
      %v2196 = vpack.c.b16 %v2193, %v2193
      %v2197 = vpack.c.b16 %v2194, %v2194
      %v2198 = vpack.c.b16 %v2195, %v2195
      %vm2199 = vsmask.f32 2304
      %vm2200 = vsmask.f32 6416
      %vm2201 = vmor %vm2199, %vm2200
      %v2203 = vshrl.u32 %v2196, 16
      %v2205 = vrot.slane %v2203, 5
      %v2206 = vshll.u32 %v2196, 16
      %v2208 = vrot.slane %v2206, 6
      %v2209 = vor.u32 %v2205, %v2208
      %v2210 = vrot.slane %v2209, 4
      %v2212 = vshrl.u32 %v2197, 16
      %v2214 = vrot.slane %v2212, 5
      %v2215 = vshll.u32 %v2197, 16
      %v2217 = vrot.slane %v2215, 6
      %v2218 = vor.u32 %v2214, %v2217
      %v2219 = vsel %vm2201, %v2210, %v2218
      %v2220 = vrot.slane %v2218, 4
      %v2222 = vshrl.u32 %v2198, 16
      %v2224 = vrot.slane %v2222, 5
      %v2225 = vshll.u32 %v2198, 16
      %v2227 = vrot.slane %v2225, 6
      %v2228 = vor.u32 %v2224, %v2227
      %v2229 = vsel %vm2201, %v2220, %v2228
      %vm2232 = vcmask 60416
      %2233 = vst.msk [vmem:[%s170] sm:$0xf] %vm2232, %v2219
      %2234 = vst.msk [vmem:[%s170 + $0x4] sm:$0xf] %vm2232, %v2229
      %v2235 = vpack.c.bf16 %v2155, %v2154
      %v2236 = vpack.c.bf16 %v2156, %v2156
      %v2239 = vunpack.c.l.b16 %v2235
      %v2240 = vunpack.c.h.b16 %v2235
      %v2241 = vunpack.c.l.b16 %v2236
      %v2242 = vpack.c.b16 %v2239, %v2239
      %v2243 = vpack.c.b16 %v2240, %v2240
      %v2244 = vpack.c.b16 %v2241, %v2241
      %vm2245 = vsmask.f32 1280
      %vm2246 = vsmask.f32 5392
      %vm2247 = vmor %vm2245, %vm2246
      %v2249 = vshrl.u32 %v2242, 16
      %v2251 = vrot.slane %v2249, 6
      %v2252 = vshll.u32 %v2242, 16
      %v2254 = vrot.slane %v2252, 7
      %v2255 = vor.u32 %v2251, %v2254
      %v2256 = vrot.slane %v2255, 4
      %v2258 = vshrl.u32 %v2243, 16
      %v2260 = vrot.slane %v2258, 6
      %v2261 = vshll.u32 %v2243, 16
      %v2263 = vrot.slane %v2261, 7
      %v2264 = vor.u32 %v2260, %v2263
      %v2265 = vsel %vm2247, %v2256, %v2264
      %v2266 = vrot.slane %v2264, 4
      %v2268 = vshrl.u32 %v2244, 16
      %v2270 = vrot.slane %v2268, 6
      %v2271 = vshll.u32 %v2244, 16
      %v2273 = vrot.slane %v2271, 7
      %v2274 = vor.u32 %v2270, %v2273
      %v2275 = vsel %vm2247, %v2266, %v2274
      %s2278 = scalar_lea.vmem %s170, 8
      %2279 = vst.msk [vmem:[%s2278] sm:$0xf] %vm2232, %v2265
      %2280 = vst.msk [vmem:[%s2278 + $0x4] sm:$0xf] %vm2232, %v2275
      %v2281 = vpack.c.bf16 %v2157, %v2156
      %v2282 = vpack.c.bf16 %v2158, %v2158
      %v2285 = vunpack.c.l.b16 %v2281
      %v2286 = vunpack.c.h.b16 %v2281
      %v2287 = vunpack.c.l.b16 %v2282
      %v2288 = vpack.c.b16 %v2285, %v2285
      %v2289 = vpack.c.b16 %v2286, %v2286
      %v2290 = vpack.c.b16 %v2287, %v2287
      %vm2291 = vsmask.f32 256
      %vm2292 = vsmask.f32 4368
      %vm2293 = vmor %vm2291, %vm2292
      %v2295 = vshrl.u32 %v2288, 16
      %v2297 = vrot.slane %v2295, 7
      %v2298 = vrot.slane %v2297, 4
      %v2300 = vshrl.u32 %v2289, 16
      %v2302 = vrot.slane %v2300, 7
      %v2303 = vshll.u32 %v2289, 16
      %v2305 = vor.u32 %v2302, %v2303
      %v2306 = vsel %vm2293, %v2298, %v2305
      %v2307 = vrot.slane %v2302, 4
      %v2309 = vshrl.u32 %v2290, 16
      %v2311 = vrot.slane %v2309, 7
      %v2312 = vshll.u32 %v2290, 16
      %v2314 = vor.u32 %v2311, %v2312
      %v2315 = vsel %vm2293, %v2307, %v2314
      %s2318 = scalar_lea.vmem %s170, 16
      %2319 = vst.msk [vmem:[%s2318] sm:$0xf] %vm2232, %v2306
      %2320 = vst.msk [vmem:[%s2318 + $0x4] sm:$0xf] %vm2232, %v2315
      %v2321 = vpack.c.bf16 %v2160, %v2159
      %v2322 = vpack.c.bf16 %v2161, %v2161
      %v2325 = vunpack.c.l.b16 %v2321
      %v2326 = vunpack.c.h.b16 %v2321
      %v2327 = vunpack.c.l.b16 %v2322
      %v2328 = vpack.c.b16 %v2325, %v2325
      %v2329 = vpack.c.b16 %v2326, %v2326
      %v2330 = vpack.c.b16 %v2327, %v2327
      %vm2331 = vsmask.f32 3328
      %vm2332 = vsmask.f32 7440
      %vm2333 = vmor %vm2331, %vm2332
      %v2335 = vshrl.u32 %v2328, 16
      %v2337 = vrot.slane %v2335, 4
      %v2338 = vshll.u32 %v2328, 16
      %v2340 = vrot.slane %v2338, 5
      %v2341 = vor.u32 %v2337, %v2340
      %v2342 = vrot.slane %v2341, 4
      %v2344 = vshll.u32 %v2329, 16
      %v2346 = vrot.slane %v2344, 5
      %v2347 = vsel %vm2333, %v2342, %v2346
      %v2348 = vshrl.u32 %v2329, 16
      %v2350 = vrot.slane %v2348, 4
      %v2351 = vor.u32 %v2350, %v2346
      %v2352 = vrot.slane %v2351, 4
      %v2354 = vshll.u32 %v2330, 16
      %v2356 = vrot.slane %v2354, 5
      %v2357 = vsel %vm2333, %v2352, %v2356
      %s2360 = scalar_lea.vmem %s170, 24
      %2361 = vst.msk [vmem:[%s2360] sm:$0xf] %vm2232, %v2347
      %2362 = vst.msk [vmem:[%s2360 + $0x4] sm:$0xf] %vm2232, %v2357
      %v2363 = vpack.c.bf16 %v2162, %v2161
      %v2364 = vpack.c.bf16 %v2163, %v2163
      %v2367 = vunpack.c.l.b16 %v2363
      %v2368 = vunpack.c.h.b16 %v2363
      %v2369 = vunpack.c.l.b16 %v2364
      %v2370 = vpack.c.b16 %v2367, %v2367
      %v2371 = vpack.c.b16 %v2368, %v2368
      %v2372 = vpack.c.b16 %v2369, %v2369
      %v2374 = vshrl.u32 %v2370, 16
      %v2376 = vrot.slane %v2374, 5
      %v2377 = vshll.u32 %v2370, 16
      %v2379 = vrot.slane %v2377, 6
      %v2380 = vor.u32 %v2376, %v2379
      %v2381 = vrot.slane %v2380, 4
      %v2383 = vshrl.u32 %v2371, 16
      %v2385 = vrot.slane %v2383, 5
      %v2386 = vshll.u32 %v2371, 16
      %v2388 = vrot.slane %v2386, 6
      %v2389 = vor.u32 %v2385, %v2388
      %v2390 = vsel %vm2201, %v2381, %v2389
      %v2391 = vrot.slane %v2389, 4
      %v2393 = vshrl.u32 %v2372, 16
      %v2395 = vrot.slane %v2393, 5
      %v2396 = vshll.u32 %v2372, 16
      %v2398 = vrot.slane %v2396, 6
      %v2399 = vor.u32 %v2395, %v2398
      %v2400 = vsel %vm2201, %v2391, %v2399
      %s2403 = scalar_lea.vmem %s170, 32
      %2404 = vst.msk [vmem:[%s2403] sm:$0xf] %vm2232, %v2390
      %2405 = vst.msk [vmem:[%s2403 + $0x4] sm:$0xf] %vm2232, %v2400
      %v2406 = vpack.c.bf16 %v2164, %v2163
      %v2407 = vpack.c.bf16 %v2165, %v2165
      %v2410 = vunpack.c.l.b16 %v2406
      %v2411 = vunpack.c.h.b16 %v2406
      %v2412 = vunpack.c.l.b16 %v2407
      %v2413 = vpack.c.b16 %v2410, %v2410
      %v2414 = vpack.c.b16 %v2411, %v2411
      %v2415 = vpack.c.b16 %v2412, %v2412
      %v2417 = vshrl.u32 %v2413, 16
      %v2419 = vrot.slane %v2417, 6
      %v2420 = vshll.u32 %v2413, 16
      %v2422 = vrot.slane %v2420, 7
      %v2423 = vor.u32 %v2419, %v2422
      %v2424 = vrot.slane %v2423, 4
      %v2426 = vshrl.u32 %v2414, 16
      %v2428 = vrot.slane %v2426, 6
      %v2429 = vshll.u32 %v2414, 16
      %v2431 = vrot.slane %v2429, 7
      %v2432 = vor.u32 %v2428, %v2431
      %v2433 = vsel %vm2247, %v2424, %v2432
      %v2434 = vrot.slane %v2432, 4
      %v2436 = vshrl.u32 %v2415, 16
      %v2438 = vrot.slane %v2436, 6
      %v2439 = vshll.u32 %v2415, 16
      %v2441 = vrot.slane %v2439, 7
      %v2442 = vor.u32 %v2438, %v2441
      %v2443 = vsel %vm2247, %v2434, %v2442
      %s2446 = scalar_lea.vmem %s170, 40
      %2447 = vst.msk [vmem:[%s2446] sm:$0xf] %vm2232, %v2433
      %2448 = vst.msk [vmem:[%s2446 + $0x4] sm:$0xf] %vm2232, %v2443
      %v2449 = vpack.c.bf16 %v2166, %v2165
      %v2450 = vpack.c.bf16 %v2167, %v2167
      %v2453 = vunpack.c.l.b16 %v2449
      %v2454 = vunpack.c.h.b16 %v2449
      %v2455 = vunpack.c.l.b16 %v2450
      %v2456 = vpack.c.b16 %v2453, %v2453
      %v2457 = vpack.c.b16 %v2454, %v2454
      %v2458 = vpack.c.b16 %v2455, %v2455
      %v2460 = vshrl.u32 %v2456, 16
      %v2462 = vrot.slane %v2460, 7
      %v2463 = vrot.slane %v2462, 4
      %v2465 = vshrl.u32 %v2457, 16
      %v2467 = vrot.slane %v2465, 7
      %v2468 = vshll.u32 %v2457, 16
      %v2470 = vor.u32 %v2467, %v2468
      %v2471 = vsel %vm2293, %v2463, %v2470
      %v2472 = vrot.slane %v2467, 4
      %v2474 = vshrl.u32 %v2458, 16
      %v2476 = vrot.slane %v2474, 7
      %v2477 = vshll.u32 %v2458, 16
      %v2479 = vor.u32 %v2476, %v2477
      %v2480 = vsel %vm2293, %v2472, %v2479
      %s2483 = scalar_lea.vmem %s170, 48
      %2484 = vst.msk [vmem:[%s2483] sm:$0xf] %vm2232, %v2471
      %2485 = vst.msk [vmem:[%s2483 + $0x4] sm:$0xf] %vm2232, %v2480
      %v2486 = vpack.c.bf16 %v2169, %v2168
      %v2487 = vpack.c.bf16 %v2170, %v2170
      %v2490 = vunpack.c.l.b16 %v2486
      %v2491 = vunpack.c.h.b16 %v2486
      %v2492 = vunpack.c.l.b16 %v2487
      %v2493 = vpack.c.b16 %v2490, %v2490
      %v2494 = vpack.c.b16 %v2491, %v2491
      %v2495 = vpack.c.b16 %v2492, %v2492
      %v2497 = vshrl.u32 %v2493, 16
      %v2499 = vrot.slane %v2497, 4
      %v2500 = vshll.u32 %v2493, 16
      %v2502 = vrot.slane %v2500, 5
      %v2503 = vor.u32 %v2499, %v2502
      %v2504 = vrot.slane %v2503, 4
      %v2506 = vshll.u32 %v2494, 16
      %v2508 = vrot.slane %v2506, 5
      %v2509 = vsel %vm2333, %v2504, %v2508
      %v2510 = vshrl.u32 %v2494, 16
      %v2512 = vrot.slane %v2510, 4
      %v2513 = vor.u32 %v2512, %v2508
      %v2514 = vrot.slane %v2513, 4
      %v2516 = vshll.u32 %v2495, 16
      %v2518 = vrot.slane %v2516, 5
      %v2519 = vsel %vm2333, %v2514, %v2518
      %s2522 = scalar_lea.vmem %s170, 56
      %2523 = vst.msk [vmem:[%s2522] sm:$0xf] %vm2232, %v2509
      %2524 = vst.msk [vmem:[%s2522 + $0x4] sm:$0xf] %vm2232, %v2519
      %v2525 = vpack.c.bf16 %v2171, %v2170
      %v2526 = vpack.c.bf16 %v2172, %v2172
      %v2529 = vunpack.c.l.b16 %v2525
      %v2530 = vunpack.c.h.b16 %v2525
      %v2531 = vunpack.c.l.b16 %v2526
      %v2532 = vpack.c.b16 %v2529, %v2529
      %v2533 = vpack.c.b16 %v2530, %v2530
      %v2534 = vpack.c.b16 %v2531, %v2531
      %v2536 = vshrl.u32 %v2532, 16
      %v2538 = vrot.slane %v2536, 5
      %v2539 = vshll.u32 %v2532, 16
      %v2541 = vrot.slane %v2539, 6
      %v2542 = vor.u32 %v2538, %v2541
      %v2543 = vrot.slane %v2542, 4
      %v2545 = vshrl.u32 %v2533, 16
      %v2547 = vrot.slane %v2545, 5
      %v2548 = vshll.u32 %v2533, 16
      %v2550 = vrot.slane %v2548, 6
      %v2551 = vor.u32 %v2547, %v2550
      %v2552 = vsel %vm2201, %v2543, %v2551
      %v2553 = vrot.slane %v2551, 4
      %v2555 = vshrl.u32 %v2534, 16
      %v2557 = vrot.slane %v2555, 5
      %v2558 = vshll.u32 %v2534, 16
      %v2560 = vrot.slane %v2558, 6
      %v2561 = vor.u32 %v2557, %v2560
      %v2562 = vsel %vm2201, %v2553, %v2561
      %s2565 = scalar_lea.vmem %s170, 64
      %2566 = vst.msk [vmem:[%s2565] sm:$0xf] %vm2232, %v2552
      %2567 = vst.msk [vmem:[%s2565 + $0x4] sm:$0xf] %vm2232, %v2562
      %v2568 = vpack.c.bf16 %v2173, %v2172
      %v2569 = vpack.c.bf16 %v2174, %v2174
      %v2572 = vunpack.c.l.b16 %v2568
      %v2573 = vunpack.c.h.b16 %v2568
      %v2574 = vunpack.c.l.b16 %v2569
      %v2575 = vpack.c.b16 %v2572, %v2572
      %v2576 = vpack.c.b16 %v2573, %v2573
      %v2577 = vpack.c.b16 %v2574, %v2574
      %v2579 = vshrl.u32 %v2575, 16
      %v2581 = vrot.slane %v2579, 6
      %v2582 = vshll.u32 %v2575, 16
      %v2584 = vrot.slane %v2582, 7
      %v2585 = vor.u32 %v2581, %v2584
      %v2586 = vrot.slane %v2585, 4
      %v2588 = vshrl.u32 %v2576, 16
      %v2590 = vrot.slane %v2588, 6
      %v2591 = vshll.u32 %v2576, 16
      %v2593 = vrot.slane %v2591, 7
      %v2594 = vor.u32 %v2590, %v2593
      %v2595 = vsel %vm2247, %v2586, %v2594
      %v2596 = vrot.slane %v2594, 4
      %v2598 = vshrl.u32 %v2577, 16
      %v2600 = vrot.slane %v2598, 6
      %v2601 = vshll.u32 %v2577, 16
      %v2603 = vrot.slane %v2601, 7
      %v2604 = vor.u32 %v2600, %v2603
      %v2605 = vsel %vm2247, %v2596, %v2604
      %s2608 = scalar_lea.vmem %s170, 72
      %2609 = vst.msk [vmem:[%s2608] sm:$0xf] %vm2232, %v2595
      %2610 = vst.msk [vmem:[%s2608 + $0x4] sm:$0xf] %vm2232, %v2605
      %v2611 = vpack.c.bf16 %v2175, %v2174
      %v2612 = vpack.c.bf16 %v2176, %v2176
      %v2615 = vunpack.c.l.b16 %v2611
      %v2616 = vunpack.c.h.b16 %v2611
      %v2617 = vunpack.c.l.b16 %v2612
      %v2618 = vpack.c.b16 %v2615, %v2615
      %v2619 = vpack.c.b16 %v2616, %v2616
      %v2620 = vpack.c.b16 %v2617, %v2617
      %v2622 = vshrl.u32 %v2618, 16
      %v2624 = vrot.slane %v2622, 7
      %v2625 = vrot.slane %v2624, 4
      %v2627 = vshrl.u32 %v2619, 16
      %v2629 = vrot.slane %v2627, 7
      %v2630 = vshll.u32 %v2619, 16
      %v2632 = vor.u32 %v2629, %v2630
      %v2633 = vsel %vm2293, %v2625, %v2632
      %v2634 = vrot.slane %v2629, 4
      %v2636 = vshrl.u32 %v2620, 16
      %v2638 = vrot.slane %v2636, 7
      %v2639 = vshll.u32 %v2620, 16
      %v2641 = vor.u32 %v2638, %v2639
      %v2642 = vsel %vm2293, %v2634, %v2641
      %s2645 = scalar_lea.vmem %s170, 80
      %2646 = vst.msk [vmem:[%s2645] sm:$0xf] %vm2232, %v2633
      %2647 = vst.msk [vmem:[%s2645 + $0x4] sm:$0xf] %vm2232, %v2642
      %v2648 = vpack.c.bf16 %v2178, %v2177
      %v2649 = vpack.c.bf16 %v2179, %v2179
      %v2652 = vunpack.c.l.b16 %v2648
      %v2653 = vunpack.c.h.b16 %v2648
      %v2654 = vunpack.c.l.b16 %v2649
      %v2655 = vpack.c.b16 %v2652, %v2652
      %v2656 = vpack.c.b16 %v2653, %v2653
      %v2657 = vpack.c.b16 %v2654, %v2654
      %v2659 = vshrl.u32 %v2655, 16
      %v2661 = vrot.slane %v2659, 4
      %v2662 = vshll.u32 %v2655, 16
      %v2664 = vrot.slane %v2662, 5
      %v2665 = vor.u32 %v2661, %v2664
      %v2666 = vrot.slane %v2665, 4
      %v2668 = vshll.u32 %v2656, 16
      %v2670 = vrot.slane %v2668, 5
      %v2671 = vsel %vm2333, %v2666, %v2670
      %v2672 = vshrl.u32 %v2656, 16
      %v2674 = vrot.slane %v2672, 4
      %v2675 = vor.u32 %v2674, %v2670
      %v2676 = vrot.slane %v2675, 4
      %v2678 = vshll.u32 %v2657, 16
      %v2680 = vrot.slane %v2678, 5
      %v2681 = vsel %vm2333, %v2676, %v2680
      %s2684 = scalar_lea.vmem %s170, 88
      %2685 = vst.msk [vmem:[%s2684] sm:$0xf] %vm2232, %v2671
      %2686 = vst.msk [vmem:[%s2684 + $0x4] sm:$0xf] %vm2232, %v2681
      %v2687 = vpack.c.bf16 %v2180, %v2179
      %v2688 = vpack.c.bf16 %v2181, %v2181
      %v2691 = vunpack.c.l.b16 %v2687
      %v2692 = vunpack.c.h.b16 %v2687
      %v2693 = vunpack.c.l.b16 %v2688
      %v2694 = vpack.c.b16 %v2691, %v2691
      %v2695 = vpack.c.b16 %v2692, %v2692
      %v2696 = vpack.c.b16 %v2693, %v2693
      %v2698 = vshrl.u32 %v2694, 16
      %v2700 = vrot.slane %v2698, 5
      %v2701 = vshll.u32 %v2694, 16
      %v2703 = vrot.slane %v2701, 6
      %v2704 = vor.u32 %v2700, %v2703
      %v2705 = vrot.slane %v2704, 4
      %v2707 = vshrl.u32 %v2695, 16
      %v2709 = vrot.slane %v2707, 5
      %v2710 = vshll.u32 %v2695, 16
      %v2712 = vrot.slane %v2710, 6
      %v2713 = vor.u32 %v2709, %v2712
      %v2714 = vsel %vm2201, %v2705, %v2713
      %v2715 = vrot.slane %v2713, 4
      %v2717 = vshrl.u32 %v2696, 16
      %v2719 = vrot.slane %v2717, 5
      %v2720 = vshll.u32 %v2696, 16
      %v2722 = vrot.slane %v2720, 6
      %v2723 = vor.u32 %v2719, %v2722
      %v2724 = vsel %vm2201, %v2715, %v2723
      %s2727 = scalar_lea.vmem %s170, 96
      %2728 = vst.msk [vmem:[%s2727] sm:$0xf] %vm2232, %v2714
      %2729 = vst.msk [vmem:[%s2727 + $0x4] sm:$0xf] %vm2232, %v2724
      %v2730 = vpack.c.bf16 %v2182, %v2181
      %v2731 = vpack.c.bf16 %v2183, %v2183
      %v2734 = vunpack.c.l.b16 %v2730
      %v2735 = vunpack.c.h.b16 %v2730
      %v2736 = vunpack.c.l.b16 %v2731
      %v2737 = vpack.c.b16 %v2734, %v2734
      %v2738 = vpack.c.b16 %v2735, %v2735
      %v2739 = vpack.c.b16 %v2736, %v2736
      %v2741 = vshrl.u32 %v2737, 16
      %v2743 = vrot.slane %v2741, 6
      %v2744 = vshll.u32 %v2737, 16
      %v2746 = vrot.slane %v2744, 7
      %v2747 = vor.u32 %v2743, %v2746
      %v2748 = vrot.slane %v2747, 4
      %v2750 = vshrl.u32 %v2738, 16
      %v2752 = vrot.slane %v2750, 6
      %v2753 = vshll.u32 %v2738, 16
      %v2755 = vrot.slane %v2753, 7
      %v2756 = vor.u32 %v2752, %v2755
      %v2757 = vsel %vm2247, %v2748, %v2756
      %v2758 = vrot.slane %v2756, 4
      %v2760 = vshrl.u32 %v2739, 16
      %v2762 = vrot.slane %v2760, 6
      %v2763 = vshll.u32 %v2739, 16
      %v2765 = vrot.slane %v2763, 7
      %v2766 = vor.u32 %v2762, %v2765
      %v2767 = vsel %vm2247, %v2758, %v2766
      %s2770 = scalar_lea.vmem %s170, 104
      %2771 = vst.msk [vmem:[%s2770] sm:$0xf] %vm2232, %v2757
      %2772 = vst.msk [vmem:[%s2770 + $0x4] sm:$0xf] %vm2232, %v2767
      %v2773 = vpack.c.bf16 %v2184, %v2183
      %v2774 = vpack.c.bf16 %v2185, %v2185
      %v2777 = vunpack.c.l.b16 %v2773
      %v2778 = vunpack.c.h.b16 %v2773
      %v2779 = vunpack.c.l.b16 %v2774
      %v2780 = vpack.c.b16 %v2777, %v2777
      %v2781 = vpack.c.b16 %v2778, %v2778
      %v2782 = vpack.c.b16 %v2779, %v2779
      %v2784 = vshrl.u32 %v2780, 16
      %v2786 = vrot.slane %v2784, 7
      %v2787 = vrot.slane %v2786, 4
      %v2789 = vshrl.u32 %v2781, 16
      %v2791 = vrot.slane %v2789, 7
      %v2792 = vshll.u32 %v2781, 16
      %v2794 = vor.u32 %v2791, %v2792
      %v2795 = vsel %vm2293, %v2787, %v2794
      %v2796 = vrot.slane %v2791, 4
      %v2798 = vshrl.u32 %v2782, 16
      %v2800 = vrot.slane %v2798, 7
      %v2801 = vshll.u32 %v2782, 16
      %v2803 = vor.u32 %v2800, %v2801
      %v2804 = vsel %vm2293, %v2796, %v2803
      %s2807 = scalar_lea.vmem %s170, 112
      %2808 = vst.msk [vmem:[%s2807] sm:$0xf] %vm2232, %v2795
      %2809 = vst.msk [vmem:[%s2807 + $0x4] sm:$0xf] %vm2232, %v2804
      %v2810 = vpack.c.bf16 %v2187, %v2186
      %v2811 = vpack.c.bf16 %v2188, %v2188
      %v2814 = vunpack.c.l.b16 %v2810
      %v2815 = vunpack.c.h.b16 %v2810
      %v2816 = vunpack.c.l.b16 %v2811
      %v2817 = vpack.c.b16 %v2814, %v2814
      %v2818 = vpack.c.b16 %v2815, %v2815
      %v2819 = vpack.c.b16 %v2816, %v2816
      %v2821 = vshrl.u32 %v2817, 16
      %v2823 = vrot.slane %v2821, 4
      %v2824 = vshll.u32 %v2817, 16
      %v2826 = vrot.slane %v2824, 5
      %v2827 = vor.u32 %v2823, %v2826
      %v2828 = vrot.slane %v2827, 4
      %v2830 = vshll.u32 %v2818, 16
      %v2832 = vrot.slane %v2830, 5
      %v2833 = vsel %vm2333, %v2828, %v2832
      %v2834 = vshrl.u32 %v2818, 16
      %v2836 = vrot.slane %v2834, 4
      %v2837 = vor.u32 %v2836, %v2832
      %v2838 = vrot.slane %v2837, 4
      %v2840 = vshll.u32 %v2819, 16
      %v2842 = vrot.slane %v2840, 5
      %v2843 = vsel %vm2333, %v2838, %v2842
      %s2846 = scalar_lea.vmem %s170, 120
      %2847 = vst.msk [vmem:[%s2846] sm:$0xf] %vm2232, %v2833
      %2848 = vst.msk [vmem:[%s2846 + $0x4] sm:$0xf] %vm2232, %v2843
      %p2849 = scmp.lt.s32.totalorder %s14, 1
      %s2850 = scalar_select %p2849, %s14, 1
      %s2851 = smul.addr %s2850, 32
      %s2852 = smul.addr %s2851, 4
      %s2853 = scalar_lea.vmem %s3, %s2852
      // Predicated region
      $region33: #{tpu_custom_call.1} parent=31 // pred_check
        %p2854 = pneg %p100
      $region34: #{tpu_custom_call.1} parent=31 // pred_check_branch
        %2856 = sbr.rel (%p2854) target = $region36
      $region35: #{tpu_custom_call.1} parent=31 // pred_region
        _
      $region36: #{tpu_custom_call.1} parent=31 // pred_fallthru
        _
    $region32: #{tpu_custom_call.1} parent=5 // pred_fallthru
      _
    %p2857 = scmp.le.s32.totalorder 2, %s9
    // Predicated region
    $region37: #{tpu_custom_call.1} parent=5 // pred_check
      %p2858 = pneg %p2857
    $region38: #{tpu_custom_call.1} parent=5 // pred_check_branch
      %2860 = sbr.rel (%p2858) target = $region40
    $region39: #{tpu_custom_call.1} parent=5 // pred_region
      %s2861 = ssub.s32 %s9, 2
      // Predicated region
      $region41: #{tpu_custom_call.1} parent=39 // pred_check
        %p2862 = pneg %p106
      $region42: #{tpu_custom_call.1} parent=39 // pred_check_branch
        %2864 = sbr.rel (%p2862) target = $region44
      $region43: #{tpu_custom_call.1} parent=39 // pred_region
        %p2865 = scmp.lt.s32.totalorder %s15, 1
        %s2866 = scalar_select %p2865, %s15, 1
        %s2867 = smul.addr %s2866, 32
        %s2868 = smul.addr %s2867, 4
        %s2869 = scalar_lea.vmem %s3, %s2868
      $region44: #{tpu_custom_call.1} parent=39 // pred_fallthru
        _
    $region40: #{tpu_custom_call.1} parent=5 // pred_fallthru
      _
  $region6: #{tpu_custom_call.1} parent=0 // loop_footer
    %s13 = sadd.s32 1, %s9
  $region7: #{tpu_custom_call.1} parent=0 // loop_footer_branch
    %8 = sbr.rel target = $region3
  $region8: #{tpu_custom_call.1} parent=0 // loop_exit
    _

</llo_original>
